<compile_context>
chip_gen: v7x
topology: tpu7x:2x2x1
jax: 0.10.0
libtpu: 0.0.40
codegen_flags: <defaults>
</compile_context>

<pallas_src>
import functools
import math

import jax
import jax.numpy as jnp
from jax.experimental import pallas as pl
from jax.experimental.pallas import tpu as pltpu


def _gcn_kernel(x_ref, mask_ref, adj_ref, wcat_ref, bcat_ref, wau_ref, o_ref,
                *, num_hop, num_rel, proj_dim, batch_block):
    D = proj_dim
    R = num_rel
    c0 = math.sqrt(2.0 / math.pi)          # python float literal, not a captured const

    wcat = wcat_ref[...]                   # (D, (R+2)*D)   f32 or bf16
    bcat = bcat_ref[...]                   # (1, (R+2)*D)   f32
    wa_u = wau_ref[...]                    # (D, D)         f32 (gate update-half)
    wdt = wcat.dtype

    for b in range(batch_block):           # static, unrolled at trace time
        cur = x_ref[b].astype(jnp.float32)       # (N, D)
        mask = mask_ref[b].astype(jnp.float32)   # (N, 1)  0/1
        adj = adj_ref[b]                         # (N, R*N) f32 or bf16
        adt = adj.dtype

        # hop-invariant masked bias (mask is 0/1 per node row)
        mask_bias = mask * bcat                  # (N, (R+2)*D) f32

        for _ in range(num_hop):                 # static, small -> unrolled
            # One fused MXU matmul for all relations + self transform + gate cur-half.
            masked_cur = cur * mask
            proj = jnp.dot(masked_cur.astype(wdt), wcat,
                           preferred_element_type=jnp.float32) + mask_bias  # (N,(R+2)*D)

            # Neighbour aggregation: single (N, R*N) @ (R*N, D) matmul.
            rel = jnp.concatenate(
                [proj[:, k * D:(k + 1) * D] for k in range(R)], axis=0)     # (R*N, D)
            update = jnp.dot(adj, rel.astype(adt),
                             preferred_element_type=jnp.float32)            # (N, D) f32
            # + fs(cur) * mask  (already masked via masked_cur / mask_bias)
            update = update + proj[:, R * D:(R + 1) * D]

            # gate = sigmoid(update @ Wa_u + cur @ Wa_c + ba) * mask
            # (cur-half + ba come from the fused projection; sigmoid via EUP tanh)
            gate_pre = (jnp.dot(update, wa_u, preferred_element_type=jnp.float32)
                        + proj[:, (R + 1) * D:(R + 2) * D])
            gate = (0.5 * jnp.tanh(0.5 * gate_pre) + 0.5) * mask

            # tanh-approximation GeLU (matches the module's explicit GeLU)
            act = 0.5 * update * (
                1.0 + jnp.tanh(c0 * (update + 0.044715 * update * update * update)))

            cur = gate * act + (1.0 - gate) * cur

        o_ref[b] = cur.astype(o_ref.dtype)


def _ceil_to(v, m):
    return ((v + m - 1) // m) * m


def _vmem_estimate_bytes(bb, n, d, r, param_bytes, out_bytes):
    lane = lambda v: _ceil_to(max(v, 1), 128)
    sub = lambda v: _ceil_to(max(v, 1), 8)
    # double-buffered streamed per-step blocks
    stream = 2 * bb * sub(n) * (lane(d) * 4                 # x (f32)
                                + lane(1) * 4               # mask
                                + lane(r * n) * param_bytes  # adj
                                + lane(d) * out_bytes)       # out
    # weights (double-buffered by default even though constant-indexed)
    weights = 2 * (sub(d) * lane((r + 2) * d) * param_bytes
                   + sub(1) * lane((r + 2) * d) * 4
                   + sub(d) * lane(d) * 4)
    # transient compute buffers (proj, mask_bias, rel, update, gate, act, cur)
    transient = 8 * bb * sub(max(n, r * n)) * lane((r + 2) * d) * 4
    return stream + weights + transient


def gcn_layer(x, input_mask, adj, params, *, num_hop=3, num_rel=3,
              param_dtype=jnp.bfloat16, batch_block=1):
    """x: [B, N, D], input_mask: [B, N], adj: [B, R, N, N]. Returns [B, N, D].

    param_dtype (default bf16) streams the big operands (wcat, adj) at half
    HBM width on the native bf16 MXU path; biases, accumulation and all the
    gate/GELU/mask math stay f32."""
    B, N, D = x.shape
    R = num_rel
    assert adj.shape == (B, R, N, N)
    assert params["wa"].shape == (2 * D, D), "module requires input_dim == proj_dim"
    assert B % batch_block == 0

    # Fused projection weight: relations + self transform + gate's cur-half.
    wa_u = params["wa"][:D, :].astype(jnp.float32)       # gate update-half, kept f32
    wa_c = params["wa"][D:, :]                           # gate cur-half -> folded
    wcat = jnp.concatenate(
        [params["wr"][k] for k in range(R)] + [params["ws"], wa_c],
        axis=1).astype(param_dtype)                      # (D, (R+2)*D)
    bcat = jnp.concatenate(
        [params["br"][k] for k in range(R)] + [params["bs"], params["ba"]],
        axis=0).reshape(1, (R + 2) * D).astype(jnp.float32)  # (1, (R+2)*D)

    # Adjacency pre-concatenated once in HBM: (B, R, N, N) -> (B, N, R*N)
    adj_cat = jnp.transpose(adj, (0, 2, 1, 3)).reshape(B, N, R * N).astype(param_dtype)
    mask3 = input_mask.reshape(B, N, 1).astype(jnp.float32)

    Bb = batch_block
    pbytes = jnp.dtype(param_dtype).itemsize
    obytes = jnp.dtype(x.dtype).itemsize
    est = _vmem_estimate_bytes(Bb, N, D, R, pbytes, obytes)
    vmem_limit = int(min(max(2 * est, 32 * 1024 * 1024), 64 * 1024 * 1024))

    kernel = functools.partial(_gcn_kernel, num_hop=num_hop, num_rel=R,
                               proj_dim=D, batch_block=Bb)

    out = pl.pallas_call(
        kernel,
        out_shape=jax.ShapeDtypeStruct((B, N, D), x.dtype),
        grid=(B // Bb,),
        in_specs=[
            pl.BlockSpec((Bb, N, D), lambda b: (b, 0, 0)),        # x
            pl.BlockSpec((Bb, N, 1), lambda b: (b, 0, 0)),        # mask
            pl.BlockSpec((Bb, N, R * N), lambda b: (b, 0, 0)),    # adj (concatenated)
            pl.BlockSpec((D, (R + 2) * D), lambda b: (0, 0)),     # fused proj weight
            pl.BlockSpec((1, (R + 2) * D), lambda b: (0, 0)),     # fused proj bias
            pl.BlockSpec((D, D), lambda b: (0, 0)),               # Wa update-half (f32)
        ],
        out_specs=pl.BlockSpec((Bb, N, D), lambda b: (b, 0, 0)),
        compiler_params=pltpu.CompilerParams(
            dimension_semantics=("parallel",),
            vmem_limit_bytes=vmem_limit),
    )(x, mask3, adj_cat, wcat, bcat, wa_u)

    return out


def _reference(x, input_mask, adj, params, *, num_hop, num_rel):
    """Pure-JAX mirror of the PyTorch forward (inference mode)."""
    m = input_mask[..., None]                                       # (B, N, 1)
    cur = x
    c0 = math.sqrt(2.0 / math.pi)
    for _ in range(num_hop):
        nb = jnp.stack(
            [cur @ params["wr"][k] + params["br"][k] for k in range(num_rel)],
            axis=1)                                                 # (B, R, N, D)
        nb = nb * m[:, None, :, :]
        update = jnp.sum(jnp.matmul(adj, nb), axis=1) \
            + (cur @ params["ws"] + params["bs"]) * m
        gate_pre = jnp.concatenate([update, cur], axis=-1) @ params["wa"] \
            + params["ba"]
        gate = (1.0 / (1.0 + jnp.exp(-gate_pre))) * m
        act = 0.5 * update * (
            1.0 + jnp.tanh(c0 * (update + 0.044715 * update ** 3)))
        cur = gate * act + (1.0 - gate) * cur
    return cur


if __name__ == "__main__":
    # Small config: batch=2, nodes=16, input_dim=proj_dim=32, 3 relations, 3 hops.
    B, N, D = 2, 16, 32
    R, HOPS = 3, 3

    key = jax.random.PRNGKey(0)
    ks = jax.random.split(key, 12)
    ws_scale = 1.0 / math.sqrt(D)

    params = {
        # nn.Linear weights stored already transposed to [in, out]
        "wr": [jax.random.normal(ks[i], (D, D), jnp.float32) * ws_scale
               for i in range(R)],
        "br": [jax.random.normal(ks[3 + i], (D,), jnp.float32) * 0.01
               for i in range(R)],
        "ws": jax.random.normal(ks[6], (D, D), jnp.float32) * ws_scale,
        "bs": jax.random.normal(ks[7], (D,), jnp.float32) * 0.01,
        "wa": jax.random.normal(ks[8], (2 * D, D), jnp.float32)
              * (1.0 / math.sqrt(2 * D)),
        "ba": jax.random.normal(ks[9], (D,), jnp.float32) * 0.01,
    }

    x = jax.random.normal(ks[10], (B, N, D), dtype=jnp.float32)
    adj = jax.random.uniform(ks[11], (B, R, N, N), dtype=jnp.float32) / N
    # second batch element has 4 masked-out (padding) nodes
    lengths = jnp.array([[N], [N - 4]], dtype=jnp.int32)
    input_mask = (jnp.arange(N)[None, :] < lengths).astype(jnp.float32)

    ref = _reference(x, input_mask, adj, params, num_hop=HOPS, num_rel=R)

    # ---- f32 streaming path: tight check ----
    out_f32 = gcn_layer(x, input_mask, adj, params, num_hop=HOPS, num_rel=R,
                        param_dtype=jnp.float32)
    out_f32 = jax.block_until_ready(out_f32)
    assert out_f32.shape == (B, N, D), out_f32.shape
    assert jnp.allclose(out_f32, ref, atol=1e-4, rtol=1e-4), float(
        jnp.max(jnp.abs(out_f32 - ref)))

    # ---- f32 path with batch blocking (one fat grid step) ----
    out_blk = gcn_layer(x, input_mask, adj, params, num_hop=HOPS, num_rel=R,
                        param_dtype=jnp.float32, batch_block=2)
    out_blk = jax.block_until_ready(out_blk)
    assert jnp.allclose(out_blk, ref, atol=1e-4, rtol=1e-4), float(
        jnp.max(jnp.abs(out_blk - ref)))

    # ---- default bf16 weight/adj streaming path ----
    out_bf = gcn_layer(x, input_mask, adj, params, num_hop=HOPS, num_rel=R)
    out_bf = jax.block_until_ready(out_bf)
    assert out_bf.shape == (B, N, D), out_bf.shape

    def _round_bf16(a):
        return a.astype(jnp.bfloat16).astype(jnp.float32)

    params_bf = dict(params)
    params_bf["wr"] = [_round_bf16(w) for w in params["wr"]]
    params_bf["ws"] = _round_bf16(params["ws"])
    params_bf["wa"] = _round_bf16(params["wa"])
    ref_bf = _reference(x, input_mask, _round_bf16(adj), params_bf,
                        num_hop=HOPS, num_rel=R)
    assert jnp.allclose(out_bf, ref_bf, atol=5e-2, rtol=5e-2), float(
        jnp.max(jnp.abs(out_bf - ref_bf)))

    print("KERNEL_OK")
</pallas_src>

<mosaic_0001>
module attributes {stable_mosaic.version = 11 : i64} {
  func.func @_gcn_kernel(%arg0: i32, %arg1: memref<1x16x32xf32, #tpu.memory_space<vmem>>, %arg2: memref<1x16x1xf32, #tpu.memory_space<vmem>>, %arg3: memref<1x16x48xf32, #tpu.memory_space<vmem>>, %arg4: memref<32x160xf32, #tpu.memory_space<vmem>>, %arg5: memref<1x160xf32, #tpu.memory_space<vmem>>, %arg6: memref<32x32xf32, #tpu.memory_space<vmem>>, %arg7: memref<1x16x32xf32, #tpu.memory_space<vmem>>) attributes {dimension_semantics = [#tpu.dimension_semantics<parallel>], iteration_bounds = array<i64: 2>, scalar_prefetch = 0 : i64, scratch_operands = 0 : i64, tpu.core_type = #tpu.core_type<tc>, window_params = [{transform_indices = @transform_0, window_bounds = array<i64: 1, 16, 32>}, {transform_indices = @transform_1, window_bounds = array<i64: 1, 16, 1>}, {transform_indices = @transform_2, window_bounds = array<i64: 1, 16, 48>}, {pipeline_mode = #tpu.pipeline_mode<synchronous>, transform_indices = @transform_3, window_bounds = array<i64: 32, 160>}, {pipeline_mode = #tpu.pipeline_mode<synchronous>, transform_indices = @transform_4, window_bounds = array<i64: 1, 160>}, {pipeline_mode = #tpu.pipeline_mode<synchronous>, transform_indices = @transform_5, window_bounds = array<i64: 32, 32>}, {transform_indices = @transform_6, window_bounds = array<i64: 1, 16, 32>}]} {
    %c0 = arith.constant 0 : index
    %c0_0 = arith.constant 0 : index
    %0 = vector.load %arg4[%c0, %c0_0] : memref<32x160xf32, #tpu.memory_space<vmem>>, vector<32x160xf32>
    %c0_1 = arith.constant 0 : index
    %c0_2 = arith.constant 0 : index
    %1 = vector.load %arg5[%c0_1, %c0_2] : memref<1x160xf32, #tpu.memory_space<vmem>>, vector<1x160xf32>
    %c0_3 = arith.constant 0 : index
    %c0_4 = arith.constant 0 : index
    %2 = vector.load %arg6[%c0_3, %c0_4] : memref<32x32xf32, #tpu.memory_space<vmem>>, vector<32x32xf32>
    %c0_5 = arith.constant 0 : index
    %c0_6 = arith.constant 0 : index
    %c0_7 = arith.constant 0 : index
    %3 = vector.load %arg1[%c0_5, %c0_6, %c0_7] : memref<1x16x32xf32, #tpu.memory_space<vmem>>, vector<1x16x32xf32>
    %4 = vector.shape_cast %3 : vector<1x16x32xf32> to vector<16x32xf32>
    %c0_8 = arith.constant 0 : index
    %c0_9 = arith.constant 0 : index
    %c0_10 = arith.constant 0 : index
    %5 = vector.load %arg2[%c0_8, %c0_9, %c0_10] : memref<1x16x1xf32, #tpu.memory_space<vmem>>, vector<1x16x1xf32>
    %6 = vector.shape_cast %5 : vector<1x16x1xf32> to vector<16x1xf32>
    %c0_11 = arith.constant 0 : index
    %c0_12 = arith.constant 0 : index
    %c0_13 = arith.constant 0 : index
    %7 = vector.load %arg3[%c0_11, %c0_12, %c0_13] : memref<1x16x48xf32, #tpu.memory_space<vmem>>, vector<1x16x48xf32>
    %8 = vector.shape_cast %7 : vector<1x16x48xf32> to vector<16x48xf32>
    %9 = vector.broadcast %6 : vector<16x1xf32> to vector<16x160xf32>
    %10 = vector.broadcast %1 : vector<1x160xf32> to vector<16x160xf32>
    %11 = arith.mulf %9, %10 : vector<16x160xf32>
    %12 = vector.broadcast %6 : vector<16x1xf32> to vector<16x32xf32>
    %13 = arith.mulf %4, %12 : vector<16x32xf32>
    %cst = arith.constant dense<0.000000e+00> : vector<16x160xf32>
    %14 = tpu.matmul %13, %0, %cst {dimension_numbers = #tpu.dot_dimension_numbers<[1], [0], [0], [1], [0, 0, 1, 1], [], []>} : vector<16x32xf32>, vector<32x160xf32>, vector<16x160xf32> -> vector<16x160xf32>
    %15 = arith.addf %14, %11 : vector<16x160xf32>
    %16 = vector.extract_strided_slice %15 {offsets = [0, 0], sizes = [16, 32], strides = [1, 1]} : vector<16x160xf32> to vector<16x32xf32>
    %17 = vector.extract_strided_slice %15 {offsets = [0, 32], sizes = [16, 32], strides = [1, 1]} : vector<16x160xf32> to vector<16x32xf32>
    %18 = vector.extract_strided_slice %15 {offsets = [0, 64], sizes = [16, 32], strides = [1, 1]} : vector<16x160xf32> to vector<16x32xf32>
    %19 = tpu.concatenate %16, %17, %18 in 0 : vector<16x32xf32>, vector<16x32xf32>, vector<16x32xf32> -> vector<48x32xf32>
    %cst_14 = arith.constant dense<0.000000e+00> : vector<16x32xf32>
    %20 = tpu.matmul %8, %19, %cst_14 {dimension_numbers = #tpu.dot_dimension_numbers<[1], [0], [0], [1], [0, 0, 1, 1], [], []>} : vector<16x48xf32>, vector<48x32xf32>, vector<16x32xf32> -> vector<16x32xf32>
    %21 = vector.extract_strided_slice %15 {offsets = [0, 96], sizes = [16, 32], strides = [1, 1]} : vector<16x160xf32> to vector<16x32xf32>
    %22 = arith.addf %20, %21 : vector<16x32xf32>
    %cst_15 = arith.constant dense<0.000000e+00> : vector<16x32xf32>
    %23 = tpu.matmul %22, %2, %cst_15 {dimension_numbers = #tpu.dot_dimension_numbers<[1], [0], [0], [1], [0, 0, 1, 1], [], []>} : vector<16x32xf32>, vector<32x32xf32>, vector<16x32xf32> -> vector<16x32xf32>
    %24 = vector.extract_strided_slice %15 {offsets = [0, 128], sizes = [16, 32], strides = [1, 1]} : vector<16x160xf32> to vector<16x32xf32>
    %25 = arith.addf %23, %24 : vector<16x32xf32>
    %cst_16 = arith.constant 5.000000e-01 : f32
    %26 = vector.broadcast %cst_16 : f32 to vector<16x32xf32>
    %27 = arith.mulf %26, %25 : vector<16x32xf32>
    %28 = math.tanh %27 : vector<16x32xf32>
    %cst_17 = arith.constant 5.000000e-01 : f32
    %29 = vector.broadcast %cst_17 : f32 to vector<16x32xf32>
    %30 = arith.mulf %29, %28 : vector<16x32xf32>
    %cst_18 = arith.constant 5.000000e-01 : f32
    %31 = vector.broadcast %cst_18 : f32 to vector<16x32xf32>
    %32 = arith.addf %30, %31 : vector<16x32xf32>
    %33 = vector.broadcast %6 : vector<16x1xf32> to vector<16x32xf32>
    %34 = arith.mulf %32, %33 : vector<16x32xf32>
    %cst_19 = arith.constant 5.000000e-01 : f32
    %35 = vector.broadcast %cst_19 : f32 to vector<16x32xf32>
    %36 = arith.mulf %35, %22 : vector<16x32xf32>
    %cst_20 = arith.constant 4.471500e-02 : f32
    %37 = vector.broadcast %cst_20 : f32 to vector<16x32xf32>
    %38 = arith.mulf %37, %22 : vector<16x32xf32>
    %39 = arith.mulf %38, %22 : vector<16x32xf32>
    %40 = arith.mulf %39, %22 : vector<16x32xf32>
    %41 = arith.addf %22, %40 : vector<16x32xf32>
    %cst_21 = arith.constant 0.797884583 : f32
    %42 = vector.broadcast %cst_21 : f32 to vector<16x32xf32>
    %43 = arith.mulf %42, %41 : vector<16x32xf32>
    %44 = math.tanh %43 : vector<16x32xf32>
    %cst_22 = arith.constant 1.000000e+00 : f32
    %45 = vector.broadcast %cst_22 : f32 to vector<16x32xf32>
    %46 = arith.addf %45, %44 : vector<16x32xf32>
    %47 = arith.mulf %36, %46 : vector<16x32xf32>
    %48 = arith.mulf %34, %47 : vector<16x32xf32>
    %cst_23 = arith.constant 1.000000e+00 : f32
    %49 = vector.broadcast %cst_23 : f32 to vector<16x32xf32>
    %50 = arith.subf %49, %34 : vector<16x32xf32>
    %51 = arith.mulf %50, %4 : vector<16x32xf32>
    %52 = arith.addf %48, %51 : vector<16x32xf32>
    %53 = vector.broadcast %6 : vector<16x1xf32> to vector<16x32xf32>
    %54 = arith.mulf %52, %53 : vector<16x32xf32>
    %cst_24 = arith.constant dense<0.000000e+00> : vector<16x160xf32>
    %55 = tpu.matmul %54, %0, %cst_24 {dimension_numbers = #tpu.dot_dimension_numbers<[1], [0], [0], [1], [0, 0, 1, 1], [], []>} : vector<16x32xf32>, vector<32x160xf32>, vector<16x160xf32> -> vector<16x160xf32>
    %56 = arith.addf %55, %11 : vector<16x160xf32>
    %57 = vector.extract_strided_slice %56 {offsets = [0, 0], sizes = [16, 32], strides = [1, 1]} : vector<16x160xf32> to vector<16x32xf32>
    %58 = vector.extract_strided_slice %56 {offsets = [0, 32], sizes = [16, 32], strides = [1, 1]} : vector<16x160xf32> to vector<16x32xf32>
    %59 = vector.extract_strided_slice %56 {offsets = [0, 64], sizes = [16, 32], strides = [1, 1]} : vector<16x160xf32> to vector<16x32xf32>
    %60 = tpu.concatenate %57, %58, %59 in 0 : vector<16x32xf32>, vector<16x32xf32>, vector<16x32xf32> -> vector<48x32xf32>
    %cst_25 = arith.constant dense<0.000000e+00> : vector<16x32xf32>
    %61 = tpu.matmul %8, %60, %cst_25 {dimension_numbers = #tpu.dot_dimension_numbers<[1], [0], [0], [1], [0, 0, 1, 1], [], []>} : vector<16x48xf32>, vector<48x32xf32>, vector<16x32xf32> -> vector<16x32xf32>
    %62 = vector.extract_strided_slice %56 {offsets = [0, 96], sizes = [16, 32], strides = [1, 1]} : vector<16x160xf32> to vector<16x32xf32>
    %63 = arith.addf %61, %62 : vector<16x32xf32>
    %cst_26 = arith.constant dense<0.000000e+00> : vector<16x32xf32>
    %64 = tpu.matmul %63, %2, %cst_26 {dimension_numbers = #tpu.dot_dimension_numbers<[1], [0], [0], [1], [0, 0, 1, 1], [], []>} : vector<16x32xf32>, vector<32x32xf32>, vector<16x32xf32> -> vector<16x32xf32>
    %65 = vector.extract_strided_slice %56 {offsets = [0, 128], sizes = [16, 32], strides = [1, 1]} : vector<16x160xf32> to vector<16x32xf32>
    %66 = arith.addf %64, %65 : vector<16x32xf32>
    %cst_27 = arith.constant 5.000000e-01 : f32
    %67 = vector.broadcast %cst_27 : f32 to vector<16x32xf32>
    %68 = arith.mulf %67, %66 : vector<16x32xf32>
    %69 = math.tanh %68 : vector<16x32xf32>
    %cst_28 = arith.constant 5.000000e-01 : f32
    %70 = vector.broadcast %cst_28 : f32 to vector<16x32xf32>
    %71 = arith.mulf %70, %69 : vector<16x32xf32>
    %cst_29 = arith.constant 5.000000e-01 : f32
    %72 = vector.broadcast %cst_29 : f32 to vector<16x32xf32>
    %73 = arith.addf %71, %72 : vector<16x32xf32>
    %74 = vector.broadcast %6 : vector<16x1xf32> to vector<16x32xf32>
    %75 = arith.mulf %73, %74 : vector<16x32xf32>
    %cst_30 = arith.constant 5.000000e-01 : f32
    %76 = vector.broadcast %cst_30 : f32 to vector<16x32xf32>
    %77 = arith.mulf %76, %63 : vector<16x32xf32>
    %cst_31 = arith.constant 4.471500e-02 : f32
    %78 = vector.broadcast %cst_31 : f32 to vector<16x32xf32>
    %79 = arith.mulf %78, %63 : vector<16x32xf32>
    %80 = arith.mulf %79, %63 : vector<16x32xf32>
    %81 = arith.mulf %80, %63 : vector<16x32xf32>
    %82 = arith.addf %63, %81 : vector<16x32xf32>
    %cst_32 = arith.constant 0.797884583 : f32
    %83 = vector.broadcast %cst_32 : f32 to vector<16x32xf32>
    %84 = arith.mulf %83, %82 : vector<16x32xf32>
    %85 = math.tanh %84 : vector<16x32xf32>
    %cst_33 = arith.constant 1.000000e+00 : f32
    %86 = vector.broadcast %cst_33 : f32 to vector<16x32xf32>
    %87 = arith.addf %86, %85 : vector<16x32xf32>
    %88 = arith.mulf %77, %87 : vector<16x32xf32>
    %89 = arith.mulf %75, %88 : vector<16x32xf32>
    %cst_34 = arith.constant 1.000000e+00 : f32
    %90 = vector.broadcast %cst_34 : f32 to vector<16x32xf32>
    %91 = arith.subf %90, %75 : vector<16x32xf32>
    %92 = arith.mulf %91, %52 : vector<16x32xf32>
    %93 = arith.addf %89, %92 : vector<16x32xf32>
    %94 = vector.broadcast %6 : vector<16x1xf32> to vector<16x32xf32>
    %95 = arith.mulf %93, %94 : vector<16x32xf32>
    %cst_35 = arith.constant dense<0.000000e+00> : vector<16x160xf32>
    %96 = tpu.matmul %95, %0, %cst_35 {dimension_numbers = #tpu.dot_dimension_numbers<[1], [0], [0], [1], [0, 0, 1, 1], [], []>} : vector<16x32xf32>, vector<32x160xf32>, vector<16x160xf32> -> vector<16x160xf32>
    %97 = arith.addf %96, %11 : vector<16x160xf32>
    %98 = vector.extract_strided_slice %97 {offsets = [0, 0], sizes = [16, 32], strides = [1, 1]} : vector<16x160xf32> to vector<16x32xf32>
    %99 = vector.extract_strided_slice %97 {offsets = [0, 32], sizes = [16, 32], strides = [1, 1]} : vector<16x160xf32> to vector<16x32xf32>
    %100 = vector.extract_strided_slice %97 {offsets = [0, 64], sizes = [16, 32], strides = [1, 1]} : vector<16x160xf32> to vector<16x32xf32>
    %101 = tpu.concatenate %98, %99, %100 in 0 : vector<16x32xf32>, vector<16x32xf32>, vector<16x32xf32> -> vector<48x32xf32>
    %cst_36 = arith.constant dense<0.000000e+00> : vector<16x32xf32>
    %102 = tpu.matmul %8, %101, %cst_36 {dimension_numbers = #tpu.dot_dimension_numbers<[1], [0], [0], [1], [0, 0, 1, 1], [], []>} : vector<16x48xf32>, vector<48x32xf32>, vector<16x32xf32> -> vector<16x32xf32>
    %103 = vector.extract_strided_slice %97 {offsets = [0, 96], sizes = [16, 32], strides = [1, 1]} : vector<16x160xf32> to vector<16x32xf32>
    %104 = arith.addf %102, %103 : vector<16x32xf32>
    %cst_37 = arith.constant dense<0.000000e+00> : vector<16x32xf32>
    %105 = tpu.matmul %104, %2, %cst_37 {dimension_numbers = #tpu.dot_dimension_numbers<[1], [0], [0], [1], [0, 0, 1, 1], [], []>} : vector<16x32xf32>, vector<32x32xf32>, vector<16x32xf32> -> vector<16x32xf32>
    %106 = vector.extract_strided_slice %97 {offsets = [0, 128], sizes = [16, 32], strides = [1, 1]} : vector<16x160xf32> to vector<16x32xf32>
    %107 = arith.addf %105, %106 : vector<16x32xf32>
    %cst_38 = arith.constant 5.000000e-01 : f32
    %108 = vector.broadcast %cst_38 : f32 to vector<16x32xf32>
    %109 = arith.mulf %108, %107 : vector<16x32xf32>
    %110 = math.tanh %109 : vector<16x32xf32>
    %cst_39 = arith.constant 5.000000e-01 : f32
    %111 = vector.broadcast %cst_39 : f32 to vector<16x32xf32>
    %112 = arith.mulf %111, %110 : vector<16x32xf32>
    %cst_40 = arith.constant 5.000000e-01 : f32
    %113 = vector.broadcast %cst_40 : f32 to vector<16x32xf32>
    %114 = arith.addf %112, %113 : vector<16x32xf32>
    %115 = vector.broadcast %6 : vector<16x1xf32> to vector<16x32xf32>
    %116 = arith.mulf %114, %115 : vector<16x32xf32>
    %cst_41 = arith.constant 5.000000e-01 : f32
    %117 = vector.broadcast %cst_41 : f32 to vector<16x32xf32>
    %118 = arith.mulf %117, %104 : vector<16x32xf32>
    %cst_42 = arith.constant 4.471500e-02 : f32
    %119 = vector.broadcast %cst_42 : f32 to vector<16x32xf32>
    %120 = arith.mulf %119, %104 : vector<16x32xf32>
    %121 = arith.mulf %120, %104 : vector<16x32xf32>
    %122 = arith.mulf %121, %104 : vector<16x32xf32>
    %123 = arith.addf %104, %122 : vector<16x32xf32>
    %cst_43 = arith.constant 0.797884583 : f32
    %124 = vector.broadcast %cst_43 : f32 to vector<16x32xf32>
    %125 = arith.mulf %124, %123 : vector<16x32xf32>
    %126 = math.tanh %125 : vector<16x32xf32>
    %cst_44 = arith.constant 1.000000e+00 : f32
    %127 = vector.broadcast %cst_44 : f32 to vector<16x32xf32>
    %128 = arith.addf %127, %126 : vector<16x32xf32>
    %129 = arith.mulf %118, %128 : vector<16x32xf32>
    %130 = arith.mulf %116, %129 : vector<16x32xf32>
    %cst_45 = arith.constant 1.000000e+00 : f32
    %131 = vector.broadcast %cst_45 : f32 to vector<16x32xf32>
    %132 = arith.subf %131, %116 : vector<16x32xf32>
    %133 = arith.mulf %132, %93 : vector<16x32xf32>
    %134 = arith.addf %130, %133 : vector<16x32xf32>
    %c0_46 = arith.constant 0 : index
    %c0_47 = arith.constant 0 : index
    %c0_48 = arith.constant 0 : index
    %135 = vector.load %arg7[%c0_46, %c0_47, %c0_48] : memref<1x16x32xf32, #tpu.memory_space<vmem>>, vector<1x16x32xf32>
    %136 = vector.shape_cast %135 : vector<1x16x32xf32> to vector<16x32xf32>
    %137 = vector.shape_cast %134 : vector<16x32xf32> to vector<1x16x32xf32>
    tpu.vector_store %arg7[%c0_46, %c0_47, %c0_48], %137 {strides = array<i32>} : memref<1x16x32xf32, #tpu.memory_space<vmem>>, vector<1x16x32xf32>,
    return
  }
  func.func @transform_0(%arg0: i32) -> (i32, i32, i32) {
    %c0_i32 = arith.constant 0 : i32
    %c0_i32_0 = arith.constant 0 : i32
    %c0_i32_1 = arith.constant 0 : i32
    return %arg0, %c0_i32, %c0_i32_0 : i32, i32, i32
  }
  func.func @transform_1(%arg0: i32) -> (i32, i32, i32) {
    %c0_i32 = arith.constant 0 : i32
    %c0_i32_0 = arith.constant 0 : i32
    %c0_i32_1 = arith.constant 0 : i32
    return %arg0, %c0_i32, %c0_i32_0 : i32, i32, i32
  }
  func.func @transform_2(%arg0: i32) -> (i32, i32, i32) {
    %c0_i32 = arith.constant 0 : i32
    %c0_i32_0 = arith.constant 0 : i32
    %c0_i32_1 = arith.constant 0 : i32
    return %arg0, %c0_i32, %c0_i32_0 : i32, i32, i32
  }
  func.func @transform_3(%arg0: i32) -> (i32, i32) {
    %c0_i32 = arith.constant 0 : i32
    %c0_i32_0 = arith.constant 0 : i32
    %c0_i32_1 = arith.constant 0 : i32
    return %c0_i32, %c0_i32_0 : i32, i32
  }
  func.func @transform_4(%arg0: i32) -> (i32, i32) {
    %c0_i32 = arith.constant 0 : i32
    %c0_i32_0 = arith.constant 0 : i32
    %c0_i32_1 = arith.constant 0 : i32
    return %c0_i32, %c0_i32_0 : i32, i32
  }
  func.func @transform_5(%arg0: i32) -> (i32, i32) {
    %c0_i32 = arith.constant 0 : i32
    %c0_i32_0 = arith.constant 0 : i32
    %c0_i32_1 = arith.constant 0 : i32
    return %c0_i32, %c0_i32_0 : i32, i32
  }
  func.func @transform_6(%arg0: i32) -> (i32, i32, i32) {
    %c0_i32 = arith.constant 0 : i32
    %c0_i32_0 = arith.constant 0 : i32
    %c0_i32_1 = arith.constant 0 : i32
    return %arg0, %c0_i32, %c0_i32_0 : i32, i32, i32
  }
}

</mosaic_0001>

<llo_original>
// kernel: tpu_custom_call.1
$region0: #{tpu_custom_call.1}
  #allocation0 [shape = 'u32[]', space=smem, size = 0x4, offset = 0x4, fixed_abs, tag = 'smem constant byte address 0x4 - core index']
  #allocation1 [shape = 'u32[144,128]{1,0:T(1,128)}', space=vmem, size = 0x12000, scoped, tag = 'internal scratch']
  %s0 = inlined_call_operand.vmem [shape: f32[2,16,32], index: 0, kind: input, shape index: {}]
  %s1 = inlined_call_operand.vmem [shape: f32[2,16,1], index: 1, kind: input, shape index: {}]
  %s2 = inlined_call_operand.hbm [shape: f32[2,16,48], index: 2, kind: input, shape index: {}]
  %s3 = inlined_call_operand.hbm [shape: f32[32,160], index: 3, kind: input, shape index: {}]
  %s4 = inlined_call_operand.vmem [shape: f32[1,160], index: 4, kind: input, shape index: {}]
  %s5 = inlined_call_operand.hbm [shape: f32[32,32], index: 5, kind: input, shape index: {}]
  %s6 = inlined_call_operand.hbm [shape: f32[2,16,32], index: 6, kind: output, shape index: {}]
  %s7 = sld [smem:[#allocation0]]
  $region69: #{tpu_custom_call.1} parent=0
    _
  %s9 = ssub.s32 1, %s7
  %s10 = scalar_select 0, %s9, %s7
  $region1: #{tpu_custom_call.1} parent=0
    #allocation2 [shape = 'u8[16384]{0}', space=vmem, size = 0x4000, scoped, tag = 'input window, operand 2']
    #allocation3 [shape = 's32[2]{0}', space=sflag, size = 0x8, scoped, tag = 'scoped memory for tpu_custom_call.1']
    #allocation4 [shape = 's32[2]{0}', space=sflag, size = 0x8, scoped, tag = 'scoped memory for tpu_custom_call.1']
    #allocation5 [shape = 'u8[32768]{0}', space=vmem, size = 0x8000, scoped, tag = 'input window, operand 3, single buffered']
    #allocation6 [shape = 's32[1]{0}', space=sflag, size = 0x4, scoped, tag = 'scoped memory for tpu_custom_call.1']
    #allocation7 [shape = 'u8[16384]{0}', space=vmem, size = 0x4000, scoped, tag = 'input window, operand 5, single buffered']
    #allocation8 [shape = 'u8[16384]{0}', space=vmem, size = 0x4000, scoped, tag = 'output window, operand 0']
    %11 = vsyncpa [#allocation3], 0
    %s12 = scalar_lea.sflag [#allocation3], 1
    %13 = vsyncpa %s12, 0
    %14 = vsyncpa [#allocation6], 0
    %15 = vsyncpa [#allocation4], 0
    %s16 = scalar_lea.sflag [#allocation4], 1
    %17 = vsyncpa %s16, 0
    loop: start=0, step=1, limit=4
    $region2: #{tpu_custom_call.1} parent=1 // loop_pre_header
      _
    $region3: #{tpu_custom_call.1} parent=1 // loop_header
      %s19 = sphi 0, %s23
      %p20 = scmp.ge.s32.totalorder %s19, 4
      %s29 = sphi 0, %s31
      %s32 = sphi 0, %s29
      %s33 = sphi 0, %s32
      %s49 = sphi 0, %s33
      %s55 = sphi 0, %s57
      %s58 = sphi 0, %s55
      %s59 = sphi 0, %s58
      %s75 = sphi 0, %s59
      %s81 = sphi 0, %s83
      %s84 = sphi 0, %s81
      %s85 = sphi 0, %s84
      %s101 = sphi 0, %s85
      %s105 = sphi 0, %s105
      %s107 = sphi 0, %s105
      %s108 = sphi 0, %s107
      %s122 = sphi 0, %s108
      %s126 = sphi 0, %s126
      %s128 = sphi 0, %s126
      %s129 = sphi 0, %s128
      %s143 = sphi 0, %s129
      %s147 = sphi 0, %s147
      %s149 = sphi 0, %s147
      %s150 = sphi 0, %s149
      %s164 = sphi 0, %s150
      %s170 = sphi 0, %s172
      %s173 = sphi 0, %s170
      %s174 = sphi 0, %s173
      %s190 = sphi 0, %s174
    $region4: #{tpu_custom_call.1} parent=1 // loop_header_branch
      %22 = sbr.rel (%p20) target = $region8
    $region5: #{tpu_custom_call.1} parent=1 // loop_body
      %s24 = ssub.s32 %s19, 1
      %s25 = ssub.s32 %s19, 2
      %s26 = sadd.s32 %s19, 1
      %s27 = ssub.s32 %s19, %s26
      %p28 = scmp.eq.s32.totalorder %s27, 0
      %s30 = sadd.s32 %s29, 1
      %s31 = scalar_select %p28, %s29, %s30
      %p34 = pneg %p28
      %p35 = scmp.eq.s32.totalorder %s19, 1
      %p36 = por %p34, %p35
      %p37 = scmp.ne.s32.totalorder %s29, %s32
      %p38 = scmp.eq.s32.totalorder %s19, 0
      %p39 = por %p37, %p38
      %p40 = scmp.ne.s32.totalorder %s29, %s32
      %p41 = scmp.eq.s32.totalorder %s24, 1
      %p42 = por %p40, %p41
      %p43 = scmp.ne.s32.totalorder %s32, %s33
      %p44 = scmp.eq.s32.totalorder %s24, 0
      %p45 = por %p43, %p44
      %p46 = scmp.ne.s32.totalorder %s32, %s33
      %p47 = scmp.eq.s32.totalorder %s25, 1
      %p48 = por %p46, %p47
      %p50 = scmp.ne.s32.totalorder %s33, %s49
      %p51 = scmp.eq.s32.totalorder %s25, 0
      %p52 = por %p50, %p51
      %s53 = ssub.s32 %s19, %s26
      %p54 = scmp.eq.s32.totalorder %s53, 0
      %s56 = sadd.s32 %s55, 1
      %s57 = scalar_select %p54, %s55, %s56
      %p60 = pneg %p54
      %p61 = scmp.eq.s32.totalorder %s19, 1
      %p62 = por %p60, %p61
      %p63 = scmp.ne.s32.totalorder %s55, %s58
      %p64 = scmp.eq.s32.totalorder %s19, 0
      %p65 = por %p63, %p64
      %p66 = scmp.ne.s32.totalorder %s55, %s58
      %p67 = scmp.eq.s32.totalorder %s24, 1
      %p68 = por %p66, %p67
      %p69 = scmp.ne.s32.totalorder %s58, %s59
      %p70 = scmp.eq.s32.totalorder %s24, 0
      %p71 = por %p69, %p70
      %p72 = scmp.ne.s32.totalorder %s58, %s59
      %p73 = scmp.eq.s32.totalorder %s25, 1
      %p74 = por %p72, %p73
      %p76 = scmp.ne.s32.totalorder %s59, %s75
      %p77 = scmp.eq.s32.totalorder %s25, 0
      %p78 = por %p76, %p77
      %s79 = ssub.s32 %s19, %s26
      %p80 = scmp.eq.s32.totalorder %s79, 0
      %s82 = sadd.s32 %s81, 1
      %s83 = scalar_select %p80, %s81, %s82
      %p86 = pneg %p80
      %p87 = scmp.eq.s32.totalorder %s19, 1
      %p88 = por %p86, %p87
      %p89 = scmp.ne.s32.totalorder %s81, %s84
      %p90 = scmp.eq.s32.totalorder %s19, 0
      %p91 = por %p89, %p90
      %p92 = scmp.ne.s32.totalorder %s81, %s84
      %p93 = scmp.eq.s32.totalorder %s24, 1
      %p94 = por %p92, %p93
      %p95 = scmp.ne.s32.totalorder %s84, %s85
      %p96 = scmp.eq.s32.totalorder %s24, 0
      %p97 = por %p95, %p96
      %p98 = scmp.ne.s32.totalorder %s84, %s85
      %p99 = scmp.eq.s32.totalorder %s25, 1
      %p100 = por %p98, %p99
      %p102 = scmp.ne.s32.totalorder %s85, %s101
      %p103 = scmp.eq.s32.totalorder %s25, 0
      %p104 = por %p102, %p103
      %s106 = sadd.s32 %s105, 1
      %p109 = scmp.eq.s32.totalorder %s19, 1
      %p110 = scmp.ne.s32.totalorder %s105, %s107
      %p111 = scmp.eq.s32.totalorder %s19, 0
      %p112 = por %p110, %p111
      %p113 = scmp.ne.s32.totalorder %s105, %s107
      %p114 = scmp.eq.s32.totalorder %s24, 1
      %p115 = por %p113, %p114
      %p116 = scmp.ne.s32.totalorder %s107, %s108
      %p117 = scmp.eq.s32.totalorder %s24, 0
      %p118 = por %p116, %p117
      %p119 = scmp.ne.s32.totalorder %s107, %s108
      %p120 = scmp.eq.s32.totalorder %s25, 1
      %p121 = por %p119, %p120
      %p123 = scmp.ne.s32.totalorder %s108, %s122
      %p124 = scmp.eq.s32.totalorder %s25, 0
      %p125 = por %p123, %p124
      %s127 = sadd.s32 %s126, 1
      %p130 = scmp.eq.s32.totalorder %s19, 1
      %p131 = scmp.ne.s32.totalorder %s126, %s128
      %p132 = scmp.eq.s32.totalorder %s19, 0
      %p133 = por %p131, %p132
      %p134 = scmp.ne.s32.totalorder %s126, %s128
      %p135 = scmp.eq.s32.totalorder %s24, 1
      %p136 = por %p134, %p135
      %p137 = scmp.ne.s32.totalorder %s128, %s129
      %p138 = scmp.eq.s32.totalorder %s24, 0
      %p139 = por %p137, %p138
      %p140 = scmp.ne.s32.totalorder %s128, %s129
      %p141 = scmp.eq.s32.totalorder %s25, 1
      %p142 = por %p140, %p141
      %p144 = scmp.ne.s32.totalorder %s129, %s143
      %p145 = scmp.eq.s32.totalorder %s25, 0
      %p146 = por %p144, %p145
      %s148 = sadd.s32 %s147, 1
      %p151 = scmp.eq.s32.totalorder %s19, 1
      %p152 = scmp.ne.s32.totalorder %s147, %s149
      %p153 = scmp.eq.s32.totalorder %s19, 0
      %p154 = por %p152, %p153
      %p155 = scmp.ne.s32.totalorder %s147, %s149
      %p156 = scmp.eq.s32.totalorder %s24, 1
      %p157 = por %p155, %p156
      %p158 = scmp.ne.s32.totalorder %s149, %s150
      %p159 = scmp.eq.s32.totalorder %s24, 0
      %p160 = por %p158, %p159
      %p161 = scmp.ne.s32.totalorder %s149, %s150
      %p162 = scmp.eq.s32.totalorder %s25, 1
      %p163 = por %p161, %p162
      %p165 = scmp.ne.s32.totalorder %s150, %s164
      %p166 = scmp.eq.s32.totalorder %s25, 0
      %p167 = por %p165, %p166
      %s168 = ssub.s32 %s19, %s26
      %p169 = scmp.eq.s32.totalorder %s168, 0
      %s171 = sadd.s32 %s170, 1
      %s172 = scalar_select %p169, %s170, %s171
      %p175 = pneg %p169
      %p176 = scmp.eq.s32.totalorder %s19, 1
      %p177 = por %p175, %p176
      %p178 = scmp.ne.s32.totalorder %s170, %s173
      %p179 = scmp.eq.s32.totalorder %s19, 0
      %p180 = por %p178, %p179
      %p181 = scmp.ne.s32.totalorder %s170, %s173
      %p182 = scmp.eq.s32.totalorder %s24, 1
      %p183 = por %p181, %p182
      %p184 = scmp.ne.s32.totalorder %s173, %s174
      %p185 = scmp.eq.s32.totalorder %s24, 0
      %p186 = por %p184, %p185
      %p187 = scmp.ne.s32.totalorder %s173, %s174
      %p188 = scmp.eq.s32.totalorder %s25, 1
      %p189 = por %p187, %p188
      %p191 = scmp.ne.s32.totalorder %s174, %s190
      %p192 = scmp.eq.s32.totalorder %s25, 0
      %p193 = por %p191, %p192
      %p194 = scmp.le.s32.totalorder 1, %s19
      %p195 = scmp.lt.s32.totalorder %s19, 3
      %p196 = pnand %p194, %p195
      %p197 = pneg %p196
      // Predicated region
      $region9: #{tpu_custom_call.1} parent=5 // pred_check
        _
      $region10: #{tpu_custom_call.1} parent=5 // pred_check_branch
        %199 = sbr.rel (%p196) target = $region12
      $region11: #{tpu_custom_call.1} parent=5 // pred_region
        %s200 = ssub.s32 %s19, 1
        // Predicated region
        $region13: #{tpu_custom_call.1} parent=11 // pred_check
          %p201 = pneg %p118
        $region14: #{tpu_custom_call.1} parent=11 // pred_check_branch
          %203 = sbr.rel (%p201) target = $region16
        $region15: #{tpu_custom_call.1} parent=11 // pred_region
          %s205 = ssub.s32 1024, 1024
          %206 = vsyncadd [#allocation6], %s205
          %s207 = sshll.u32 [#allocation5], 4
          %s208 = int_to_ptr.vmem [resolvable:$true] %s207
          %213 = dma.hbm_to_vmem [thread:$0]  %s3, 1024, %s208, [#allocation6], 256, 256, 16
        $region16: #{tpu_custom_call.1} parent=11 // pred_fallthru
          _
        // Predicated region
        $region17: #{tpu_custom_call.1} parent=11 // pred_check
          %p214 = pneg %p139
        $region18: #{tpu_custom_call.1} parent=11 // pred_check_branch
          %216 = sbr.rel (%p214) target = $region20
        $region19: #{tpu_custom_call.1} parent=11 // pred_region
          _
        $region20: #{tpu_custom_call.1} parent=11 // pred_fallthru
          _
        // Predicated region
        $region21: #{tpu_custom_call.1} parent=11 // pred_check
          %p217 = pneg %p160
        $region22: #{tpu_custom_call.1} parent=11 // pred_check_branch
          %219 = sbr.rel (%p217) target = $region24
        $region23: #{tpu_custom_call.1} parent=11 // pred_region
          %s221 = ssub.s32 512, 512
          %222 = vsyncadd [#allocation6], %s221
          %s223 = sshll.u32 [#allocation7], 4
          %s224 = int_to_ptr.vmem [resolvable:$true] %s223
          %229 = dma.hbm_to_vmem [thread:$0]  %s5, 512, %s224, [#allocation6], 128, 128, 8
        $region24: #{tpu_custom_call.1} parent=11 // pred_fallthru
          _
      $region12: #{tpu_custom_call.1} parent=5 // pred_fallthru
        _
      %p230 = scmp.lt.s32.totalorder %s19, 2
      // Predicated region
      $region25: #{tpu_custom_call.1} parent=5 // pred_check
        %p231 = pneg %p230
      $region26: #{tpu_custom_call.1} parent=5 // pred_check_branch
        %233 = sbr.rel (%p231) target = $region28
      $region27: #{tpu_custom_call.1} parent=5 // pred_region
        // Predicated region
        $region29: #{tpu_custom_call.1} parent=27 // pred_check
          %p234 = pneg %p39
        $region30: #{tpu_custom_call.1} parent=27 // pred_check_branch
          %236 = sbr.rel (%p234) target = $region32
        $region31: #{tpu_custom_call.1} parent=27 // pred_region
          %p237 = scmp.lt.s32.totalorder %s19, 1
          %s238 = scalar_select %p237, %s19, 1
          %s239 = smul.addr %s238, 2
          %s240 = smul.addr %s239, 8
          %s241 = scalar_lea.vmem %s0, %s240
        $region32: #{tpu_custom_call.1} parent=27 // pred_fallthru
          _
        // Predicated region
        $region33: #{tpu_custom_call.1} parent=27 // pred_check
          %p242 = pneg %p65
        $region34: #{tpu_custom_call.1} parent=27 // pred_check_branch
          %244 = sbr.rel (%p242) target = $region36
        $region35: #{tpu_custom_call.1} parent=27 // pred_region
          %p245 = scmp.lt.s32.totalorder %s19, 1
          %s246 = scalar_select %p245, %s19, 1
          %s247 = smul.addr %s246, 2
          %s248 = smul.addr %s247, 8
          %s249 = scalar_lea.vmem %s1, %s248
        $region36: #{tpu_custom_call.1} parent=27 // pred_fallthru
          _
        // Predicated region
        $region37: #{tpu_custom_call.1} parent=27 // pred_check
          %p250 = pneg %p91
        $region38: #{tpu_custom_call.1} parent=27 // pred_check_branch
          %252 = sbr.rel (%p250) target = $region40
        $region39: #{tpu_custom_call.1} parent=27 // pred_region
          %s253 = sand.u32 %s81, 1
          %s254 = scalar_lea.sflag [#allocation3], %s253
          %s255 = sand.u32 %s81, 1
          %s256 = smul.addr %s255, 16
          %s257 = scalar_lea.vmem [#allocation2], %s256
          %s259 = ssub.s32 256, 256
          %260 = vsyncadd %s254, %s259
          %s261 = smul.addr %s19, 2
          %s262 = smul.addr %s261, 128
          %s263 = scalar_lea.hbm %s2, %s262
          %s264 = sshll.u32 %s257, 4
          %s265 = int_to_ptr.vmem [resolvable:$true] %s264
          %270 = dma.hbm_to_vmem [thread:$0]  %s263, 256, %s265, %s254, 128, 128, 8
        $region40: #{tpu_custom_call.1} parent=27 // pred_fallthru
          _
      $region28: #{tpu_custom_call.1} parent=5 // pred_fallthru
        _
      %p271 = scmp.le.s32.totalorder 1, %s19
      %p272 = scmp.lt.s32.totalorder %s19, 3
      %p273 = pnand %p271, %p272
      %p274 = pneg %p273
      // Predicated region
      $region41: #{tpu_custom_call.1} parent=5 // pred_check
        _
      $region42: #{tpu_custom_call.1} parent=5 // pred_check_branch
        %276 = sbr.rel (%p273) target = $region44
      $region43: #{tpu_custom_call.1} parent=5 // pred_region
        %s277 = ssub.s32 %s19, 1
        %s278 = sand.u32 %s84, 1
        %s279 = scalar_lea.sflag [#allocation3], %s278
        %s280 = sand.u32 %s84, 1
        %s281 = smul.addr %s280, 16
        %s282 = scalar_lea.vmem [#allocation2], %s281
        // Predicated region
        $region45: #{tpu_custom_call.1} parent=43 // pred_check
          %p283 = pneg %p97
        $region46: #{tpu_custom_call.1} parent=43 // pred_check_branch
          %285 = sbr.rel (%p283) target = $region48
        $region47: #{tpu_custom_call.1} parent=43 // pred_region
          %286 = dma.done %s279, 256
        $region48: #{tpu_custom_call.1} parent=43 // pred_fallthru
          _
        // Predicated region
        $region49: #{tpu_custom_call.1} parent=43 // pred_check
          %p287 = pneg %p118
        $region50: #{tpu_custom_call.1} parent=43 // pred_check_branch
          %289 = sbr.rel (%p287) target = $region52
        $region51: #{tpu_custom_call.1} parent=43 // pred_region
          %290 = dma.done [#allocation6], 1024
        $region52: #{tpu_custom_call.1} parent=43 // pred_fallthru
          _
        // Predicated region
        $region53: #{tpu_custom_call.1} parent=43 // pred_check
          %p291 = pneg %p160
        $region54: #{tpu_custom_call.1} parent=43 // pred_check_branch
          %293 = sbr.rel (%p291) target = $region56
        $region55: #{tpu_custom_call.1} parent=43 // pred_region
          %294 = dma.done [#allocation6], 512
        $region56: #{tpu_custom_call.1} parent=43 // pred_fallthru
          _
        %p295 = scmp.lt.s32.totalorder %s24, 1
        %s296 = scalar_select %p295, %s24, 1
        %s297 = smul.addr %s296, 2
        %s298 = smul.addr %s297, 8
        %s299 = scalar_lea.vmem %s0, %s298
        %p300 = pneg %p45
        %p301 = pneg %p42
        %p302 = scmp.lt.s32.totalorder %s24, 1
        %s303 = scalar_select %p302, %s24, 1
        %s304 = smul.addr %s303, 2
        %s305 = smul.addr %s304, 8
        %s306 = scalar_lea.vmem %s1, %s305
        %p307 = pneg %p71
        %p308 = pneg %p68
        %s309 = sand.u32 %s84, 1
        %s310 = scalar_lea.sflag [#allocation3], %s309
        %s311 = sand.u32 %s84, 1
        %s312 = smul.addr %s311, 16
        %s313 = scalar_lea.vmem [#allocation2], %s312
        %p314 = pneg %p97
        %p315 = pneg %p94
        %p316 = pneg %p118
        %p317 = pneg %p115
        %p318 = pneg %p139
        %p319 = pneg %p136
        %p320 = pneg %p160
        %p321 = pneg %p157
        %p322 = pneg %p186
        %p323 = pneg %p183
        %s324 = sand.u32 %s173, 1
        %s325 = scalar_lea.sflag [#allocation4], %s324
        %s326 = sand.u32 %s173, 1
        %s327 = smul.addr %s326, 16
        %s328 = scalar_lea.vmem [#allocation8], %s327
        %p329 = scmp.lt.s32.totalorder %s24, 1
        %s330 = scalar_select %p329, %s24, 1
        %s331 = smul.addr %s330, 2
        %s332 = smul.addr %s331, 8
        %s333 = scalar_lea.vmem %s0, %s332
        %p334 = scmp.lt.s32.totalorder %s24, 1
        %s335 = scalar_select %p334, %s24, 1
        %s336 = smul.addr %s335, 2
        %s337 = smul.addr %s336, 8
        %s338 = scalar_lea.vmem %s1, %s337
        %v339 = vld [vmem:[#allocation5] sm:$0xff]
        %v340 = vld [vmem:[#allocation5 + $0x8] sm:$0xff]
        %v341 = vld [vmem:[#allocation5 + $0x10] sm:$0xff]
        %v342 = vld [vmem:[#allocation5 + $0x18] sm:$0xff]
        %v343 = vld [vmem:[#allocation5 + $0x20] sm:$0xff]
        %v344 = vld [vmem:[#allocation5 + $0x28] sm:$0xff]
        %v345 = vld [vmem:[#allocation5 + $0x30] sm:$0xff]
        %v346 = vld [vmem:[#allocation5 + $0x38] sm:$0xff]
        %v347 = vld [vmem:[%s4] sm:$0x3]
        %v348 = vld [vmem:[#allocation7] sm:$0xff]
        %v349 = vld [vmem:[#allocation7 + $0x8] sm:$0xff]
        %v350 = vld [vmem:[#allocation7 + $0x10] sm:$0xff]
        %v351 = vld [vmem:[#allocation7 + $0x18] sm:$0xff]
        %v352 = vld [vmem:[%s333] sm:$0xff]
        %v353 = vld [vmem:[%s333 + $0x8] sm:$0xff]
        %v354 = vld [vmem:[%s338] sm:$0xff]
        %v355 = vld [vmem:[%s338 + $0x8] sm:$0xff]
        %v356 = vld [vmem:[%s282] sm:$0xff]
        %v357 = vld [vmem:[%s282 + $0x8] sm:$0xff]
        %359 = vset.pattern.permute.xlu0 0
        %360 = vperm.xlu0 %359, %v354
        %v361 = vpop.permute.xlu0 %360
        %364 = vset.pattern.permute.xlu0 0
        %365 = vperm.xlu0 %364, %v355
        %v366 = vpop.permute.xlu0 %365
        %v369 = vlaneseq
        %v370 = vshrl.u32 %v369, 7
        %v371 = vsub.s32 0, %v370
        %v372 = vrot.slane %v347, %v371
        %v373 = vlaneseq
        %v374 = vshrl.u32 %v373, 7
        %v375 = vsub.s32 1, %v374
        %v376 = vrot.slane %v347, %v375
        %v379 = vmul.f32 %v361, %v372
        %v380 = vmul.f32 %v361, %v376
        %v381 = vmul.f32 %v366, %v372
        %v382 = vmul.f32 %v366, %v376
        %v383 = vmul.f32 %v352, %v361
        %v384 = vmul.f32 %v353, %v366
        %vm385 = vcmask 261120
        %v387 = vsel %vm385, %v383, 0
        %v390 = vsel %vm385, %v384, 0
        %392 = vmatprep.subr.mxu0 %v340
        %393 = vmatpush1.msra.mxu0 %v339
        %394 = vmatprep.subr.mxu0 %v342
        %395 = vmatpush1.msra.mxu0 %v341
        %396 = vmatprep.subr.mxu0 %v344
        %397 = vmatpush1.msra.mxu0 %v343
        %398 = vmatprep.subr.mxu0 %v346
        %399 = vmatpush1.msra.mxu0 %v345
        %400 = vmatprep.subr.mxu0 0.0
        %401 = vmatpush1.msra.mxu0 0.0
        %402 = vmatprep.subr.mxu0 0.0
        %403 = vmatpush1.msra.mxu0 0.0
        %404 = vmatprep.subr.mxu0 0.0
        %405 = vmatpush1.msra.mxu0 0.0
        %406 = vmatprep.subr.mxu0 0.0
        %407 = vmatpush1.msra.mxu0 0.0
        %408 = vmatprep.subr.mxu0 0.0
        %409 = vmatpush1.msra.mxu0 0.0
        %410 = vmatprep.subr.mxu0 0.0
        %411 = vmatpush1.msra.mxu0 0.0
        %412 = vmatprep.subr.mxu0 0.0
        %413 = vmatpush1.msra.mxu0 0.0
        %414 = vmatprep.subr.mxu0 0.0
        %415 = vmatpush1.msra.mxu0 0.0
        %416 = vmatprep.subr.mxu0 0.0
        %417 = vmatpush1.msra.mxu0 0.0
        %418 = vmatprep.subr.mxu0 0.0
        %419 = vmatpush1.msra.mxu0 0.0
        %420 = vmatprep.subr.mxu0 0.0
        %421 = vmatpush1.msra.mxu0 0.0
        %422 = vmatprep.subr.mxu0 0.0
        %423 = vmatpush1.msra.mxu0 0.0
        %424 = vmatprep.subr.mxu0 0.0
        %425 = vmatpush1.msra.mxu0 0.0
        %426 = vmatprep.subr.mxu0 0.0
        %427 = vmatpush1.msra.mxu0 0.0
        %428 = vmatprep.subr.mxu0 0.0
        %429 = vmatpush1.msra.mxu0 0.0
        %430 = vmatprep.subr.mxu0 0.0
        %431 = vmatpush1.msra.mxu0 0.0
        %432 = vmatprep.subr.mxu0 0.0
        %433 = vmatpush1.msra.mxu0 0.0
        %434 = vmatprep.subr.mxu0 0.0
        %435 = vmatpush1.msra.mxu0 0.0
        %436 = vmatprep.subr.mxu0 0.0
        %437 = vmatpush1.msra.mxu0 0.0
        %438 = vmatprep.subr.mxu0 0.0
        %439 = vmatpush1.msra.mxu0 0.0
        %440 = vmatprep.subr.mxu0 0.0
        %441 = vmatpush1.msra.mxu0 0.0
        %442 = vmatprep.subr.mxu0 0.0
        %443 = vmatpush1.msra.mxu0 0.0
        %444 = vmatprep.subr.mxu0 0.0
        %445 = vmatpush1.msra.mxu0 0.0
        %446 = vmatprep.subr.mxu0 0.0
        %447 = vmatpush1.msra.mxu0 0.0
        %448 = vmatprep.subr.mxu0 0.0
        %449 = vmatpush1.msra.mxu0 0.0
        %450 = vmatprep.subr.mxu0 0.0
        %451 = vmatpush1.msra.mxu0 0.0
        %452 = vmatprep.subr.mxu0 0.0
        %453 = vmatpush1.msra.mxu0 0.0
        %454 = vmatprep.subr.mxu0 0.0
        %455 = vmatpush1.msra.mxu0 0.0
        %456 = vmatprep.mubr.f32.mxu0 0.0
        %457 = vmatmul.mubr.f32.gmra.mrb[0].mxu0 %v387
        %v458 = vpop.f32.mrb[0].mxu0
        %v459 = vadd.f32 %v379, %v458
        %v460 = vpop.f32.mrb[0].mxu0
        %v461 = vadd.f32 %v380, %v460
        %462 = vmatprep.mubr.f32.mxu0 0.0
        %463 = vmatmul.mubr.f32.gmra.mrb[0].mxu0 %v390
        %v464 = vpop.f32.mrb[0].mxu0
        %v465 = vadd.f32 %v381, %v464
        %v466 = vpop.f32.mrb[0].mxu0
        %v467 = vadd.f32 %v382, %v466
        %468 = vdwg.mxu0
        %471 = vrot.lane.b32.xlu0 %v459, 96
        %v472 = vpop.permute.xlu0 %471
        %473 = vrot.lane.b32.xlu0 %v465, 96
        %v474 = vpop.permute.xlu0 %473
        %477 = vrot.lane.b32.xlu0 %v459, 64
        %v478 = vpop.permute.xlu0 %477
        %479 = vrot.lane.b32.xlu0 %v465, 64
        %v480 = vpop.permute.xlu0 %479
        %483 = vrot.lane.b32.xlu0 %v459, 32
        %v484 = vpop.permute.xlu0 %483
        %485 = vrot.lane.b32.xlu0 %v465, 32
        %v486 = vpop.permute.xlu0 %485
        %vm489 = vcmask 392192
        %v491 = vsel %vm489, %v356, 0
        %v494 = vsel %vm489, %v357, 0
        %496 = vmatprep.subr.mxu0 0.0
        %497 = vmatpush1.msra.mxu0 %v459
        %498 = vmatprep.subr.mxu0 0.0
        %499 = vmatpush1.msra.mxu0 %v465
        %500 = vmatprep.subr.mxu0 0.0
        %501 = vmatpush1.msra.mxu0 %v472
        %502 = vmatprep.subr.mxu0 0.0
        %503 = vmatpush1.msra.mxu0 %v474
        %504 = vmatprep.subr.mxu0 0.0
        %505 = vmatpush1.msra.mxu0 %v478
        %506 = vmatprep.subr.mxu0 0.0
        %507 = vmatpush1.msra.mxu0 %v480
        %508 = vmatprep.subr.mxu0 0.0
        %509 = vmatpush1.msra.mxu0 0.0
        %510 = vmatprep.subr.mxu0 0.0
        %511 = vmatpush1.msra.mxu0 0.0
        %512 = vmatprep.subr.mxu0 0.0
        %513 = vmatpush1.msra.mxu0 0.0
        %514 = vmatprep.subr.mxu0 0.0
        %515 = vmatpush1.msra.mxu0 0.0
        %516 = vmatprep.subr.mxu0 0.0
        %517 = vmatpush1.msra.mxu0 0.0
        %518 = vmatprep.subr.mxu0 0.0
        %519 = vmatpush1.msra.mxu0 0.0
        %520 = vmatprep.subr.mxu0 0.0
        %521 = vmatpush1.msra.mxu0 0.0
        %522 = vmatprep.subr.mxu0 0.0
        %523 = vmatpush1.msra.mxu0 0.0
        %524 = vmatprep.subr.mxu0 0.0
        %525 = vmatpush1.msra.mxu0 0.0
        %526 = vmatprep.subr.mxu0 0.0
        %527 = vmatpush1.msra.mxu0 0.0
        %528 = vmatprep.subr.mxu0 0.0
        %529 = vmatpush1.msra.mxu0 0.0
        %530 = vmatprep.subr.mxu0 0.0
        %531 = vmatpush1.msra.mxu0 0.0
        %532 = vmatprep.subr.mxu0 0.0
        %533 = vmatpush1.msra.mxu0 0.0
        %534 = vmatprep.subr.mxu0 0.0
        %535 = vmatpush1.msra.mxu0 0.0
        %536 = vmatprep.subr.mxu0 0.0
        %537 = vmatpush1.msra.mxu0 0.0
        %538 = vmatprep.subr.mxu0 0.0
        %539 = vmatpush1.msra.mxu0 0.0
        %540 = vmatprep.subr.mxu0 0.0
        %541 = vmatpush1.msra.mxu0 0.0
        %542 = vmatprep.subr.mxu0 0.0
        %543 = vmatpush1.msra.mxu0 0.0
        %544 = vmatprep.subr.mxu0 0.0
        %545 = vmatpush1.msra.mxu0 0.0
        %546 = vmatprep.subr.mxu0 0.0
        %547 = vmatpush1.msra.mxu0 0.0
        %548 = vmatprep.subr.mxu0 0.0
        %549 = vmatpush1.msra.mxu0 0.0
        %550 = vmatprep.subr.mxu0 0.0
        %551 = vmatpush1.msra.mxu0 0.0
        %552 = vmatprep.subr.mxu0 0.0
        %553 = vmatpush1.msra.mxu0 0.0
        %554 = vmatprep.subr.mxu0 0.0
        %555 = vmatpush1.msra.mxu0 0.0
        %556 = vmatprep.subr.mxu0 0.0
        %557 = vmatpush1.msra.mxu0 0.0
        %558 = vmatprep.subr.mxu0 0.0
        %559 = vmatpush1.msra.mxu0 0.0
        %560 = vmatprep.mubr.f32.mxu0 0.0
        %561 = vmatmul.mubr.f32.gmra.mrb[0].mxu0 %v491
        %v562 = vpop.f32.mrb[0].mxu0
        %v563 = vadd.f32 %v484, %v562
        %v564 = vpop.f32.mrb[0].mxu0
        %565 = vmatprep.mubr.f32.mxu0 0.0
        %566 = vmatmul.mubr.f32.gmra.mrb[0].mxu0 %v494
        %v567 = vpop.f32.mrb[0].mxu0
        %v568 = vadd.f32 %v486, %v567
        %v569 = vpop.f32.mrb[0].mxu0
        %570 = vdwg.mxu0
        %v572 = vsel %vm385, %v563, 0
        %v575 = vsel %vm385, %v568, 0
        %577 = vmatprep.subr.mxu0 0.0
        %578 = vmatpush1.msra.mxu0 %v348
        %579 = vmatprep.subr.mxu0 0.0
        %580 = vmatpush1.msra.mxu0 %v349
        %581 = vmatprep.subr.mxu0 0.0
        %582 = vmatpush1.msra.mxu0 %v350
        %583 = vmatprep.subr.mxu0 0.0
        %584 = vmatpush1.msra.mxu0 %v351
        %585 = vmatprep.subr.mxu0 0.0
        %586 = vmatpush1.msra.mxu0 0.0
        %587 = vmatprep.subr.mxu0 0.0
        %588 = vmatpush1.msra.mxu0 0.0
        %589 = vmatprep.subr.mxu0 0.0
        %590 = vmatpush1.msra.mxu0 0.0
        %591 = vmatprep.subr.mxu0 0.0
        %592 = vmatpush1.msra.mxu0 0.0
        %593 = vmatprep.subr.mxu0 0.0
        %594 = vmatpush1.msra.mxu0 0.0
        %595 = vmatprep.subr.mxu0 0.0
        %596 = vmatpush1.msra.mxu0 0.0
        %597 = vmatprep.subr.mxu0 0.0
        %598 = vmatpush1.msra.mxu0 0.0
        %599 = vmatprep.subr.mxu0 0.0
        %600 = vmatpush1.msra.mxu0 0.0
        %601 = vmatprep.subr.mxu0 0.0
        %602 = vmatpush1.msra.mxu0 0.0
        %603 = vmatprep.subr.mxu0 0.0
        %604 = vmatpush1.msra.mxu0 0.0
        %605 = vmatprep.subr.mxu0 0.0
        %606 = vmatpush1.msra.mxu0 0.0
        %607 = vmatprep.subr.mxu0 0.0
        %608 = vmatpush1.msra.mxu0 0.0
        %609 = vmatprep.subr.mxu0 0.0
        %610 = vmatpush1.msra.mxu0 0.0
        %611 = vmatprep.subr.mxu0 0.0
        %612 = vmatpush1.msra.mxu0 0.0
        %613 = vmatprep.subr.mxu0 0.0
        %614 = vmatpush1.msra.mxu0 0.0
        %615 = vmatprep.subr.mxu0 0.0
        %616 = vmatpush1.msra.mxu0 0.0
        %617 = vmatprep.subr.mxu0 0.0
        %618 = vmatpush1.msra.mxu0 0.0
        %619 = vmatprep.subr.mxu0 0.0
        %620 = vmatpush1.msra.mxu0 0.0
        %621 = vmatprep.subr.mxu0 0.0
        %622 = vmatpush1.msra.mxu0 0.0
        %623 = vmatprep.subr.mxu0 0.0
        %624 = vmatpush1.msra.mxu0 0.0
        %625 = vmatprep.subr.mxu0 0.0
        %626 = vmatpush1.msra.mxu0 0.0
        %627 = vmatprep.subr.mxu0 0.0
        %628 = vmatpush1.msra.mxu0 0.0
        %629 = vmatprep.subr.mxu0 0.0
        %630 = vmatpush1.msra.mxu0 0.0
        %631 = vmatprep.subr.mxu0 0.0
        %632 = vmatpush1.msra.mxu0 0.0
        %633 = vmatprep.subr.mxu0 0.0
        %634 = vmatpush1.msra.mxu0 0.0
        %635 = vmatprep.subr.mxu0 0.0
        %636 = vmatpush1.msra.mxu0 0.0
        %637 = vmatprep.subr.mxu0 0.0
        %638 = vmatpush1.msra.mxu0 0.0
        %639 = vmatprep.subr.mxu0 0.0
        %640 = vmatpush1.msra.mxu0 0.0
        %641 = vmatprep.mubr.f32.mxu0 0.0
        %642 = vmatmul.mubr.f32.gmra.mrb[0].mxu0 %v572
        %v643 = vpop.f32.mrb[0].mxu0
        %v644 = vadd.f32 %v461, %v643
        %v645 = vpop.f32.mrb[0].mxu0
        %646 = vmatprep.mubr.f32.mxu0 0.0
        %647 = vmatmul.mubr.f32.gmra.mrb[0].mxu0 %v575
        %v648 = vpop.f32.mrb[0].mxu0
        %v649 = vadd.f32 %v467, %v648
        %v650 = vpop.f32.mrb[0].mxu0
        %651 = vdwg.mxu0
        %v652 = vmul.f32 %v644, 0.5
        %v653 = vmul.f32 %v649, 0.5
        %v654 = vtanh.pop %v652
        %v655 = vtanh.pop %v653
        %v656 = vmul.f32 %v654, 0.5
        %v657 = vmul.f32 %v655, 0.5
        %v658 = vadd.f32 %v656, 0.5
        %v659 = vadd.f32 %v657, 0.5
        %v660 = vmul.f32 %v658, %v361
        %v661 = vmul.f32 %v659, %v366
        %v662 = vmul.f32 %v563, 0.5
        %v663 = vmul.f32 %v568, 0.5
        %v664 = vmul.f32 %v563, 0.044715
        %v665 = vmul.f32 %v568, 0.044715
        %v666 = vmul.f32 %v664, %v563
        %v667 = vmul.f32 %v665, %v568
        %v668 = vmul.f32 %v666, %v563
        %v669 = vmul.f32 %v667, %v568
        %v670 = vadd.f32 %v563, %v668
        %v671 = vadd.f32 %v568, %v669
        %v672 = vmul.f32 %v670, 0.7978846
        %v673 = vmul.f32 %v671, 0.7978846
        %v674 = vtanh.pop %v672
        %v675 = vtanh.pop %v673
        %v676 = vadd.f32 %v674, 1.0
        %v677 = vadd.f32 %v675, 1.0
        %v678 = vmul.f32 %v662, %v676
        %v679 = vmul.f32 %v663, %v677
        %v680 = vmul.f32 %v660, %v678
        %v681 = vmul.f32 %v661, %v679
        %v682 = vsub.f32 1.0, %v660
        %v683 = vsub.f32 1.0, %v661
        %v684 = vmul.f32 %v682, %v352
        %v685 = vmul.f32 %v683, %v353
        %v686 = vadd.f32 %v680, %v684
        %v687 = vadd.f32 %v681, %v685
        %v688 = vmul.f32 %v686, %v361
        %v689 = vmul.f32 %v687, %v366
        %v691 = vsel %vm385, %v688, 0
        %v694 = vsel %vm385, %v689, 0
        %696 = vmatprep.subr.mxu0 %v340
        %697 = vmatpush1.msra.mxu0 %v339
        %698 = vmatprep.subr.mxu0 %v342
        %699 = vmatpush1.msra.mxu0 %v341
        %700 = vmatprep.subr.mxu0 %v344
        %701 = vmatpush1.msra.mxu0 %v343
        %702 = vmatprep.subr.mxu0 %v346
        %703 = vmatpush1.msra.mxu0 %v345
        %704 = vmatprep.subr.mxu0 0.0
        %705 = vmatpush1.msra.mxu0 0.0
        %706 = vmatprep.subr.mxu0 0.0
        %707 = vmatpush1.msra.mxu0 0.0
        %708 = vmatprep.subr.mxu0 0.0
        %709 = vmatpush1.msra.mxu0 0.0
        %710 = vmatprep.subr.mxu0 0.0
        %711 = vmatpush1.msra.mxu0 0.0
        %712 = vmatprep.subr.mxu0 0.0
        %713 = vmatpush1.msra.mxu0 0.0
        %714 = vmatprep.subr.mxu0 0.0
        %715 = vmatpush1.msra.mxu0 0.0
        %716 = vmatprep.subr.mxu0 0.0
        %717 = vmatpush1.msra.mxu0 0.0
        %718 = vmatprep.subr.mxu0 0.0
        %719 = vmatpush1.msra.mxu0 0.0
        %720 = vmatprep.subr.mxu0 0.0
        %721 = vmatpush1.msra.mxu0 0.0
        %722 = vmatprep.subr.mxu0 0.0
        %723 = vmatpush1.msra.mxu0 0.0
        %724 = vmatprep.subr.mxu0 0.0
        %725 = vmatpush1.msra.mxu0 0.0
        %726 = vmatprep.subr.mxu0 0.0
        %727 = vmatpush1.msra.mxu0 0.0
        %728 = vmatprep.subr.mxu0 0.0
        %729 = vmatpush1.msra.mxu0 0.0
        %730 = vmatprep.subr.mxu0 0.0
        %731 = vmatpush1.msra.mxu0 0.0
        %732 = vmatprep.subr.mxu0 0.0
        %733 = vmatpush1.msra.mxu0 0.0
        %734 = vmatprep.subr.mxu0 0.0
        %735 = vmatpush1.msra.mxu0 0.0
        %736 = vmatprep.subr.mxu0 0.0
        %737 = vmatpush1.msra.mxu0 0.0
        %738 = vmatprep.subr.mxu0 0.0
        %739 = vmatpush1.msra.mxu0 0.0
        %740 = vmatprep.subr.mxu0 0.0
        %741 = vmatpush1.msra.mxu0 0.0
        %742 = vmatprep.subr.mxu0 0.0
        %743 = vmatpush1.msra.mxu0 0.0
        %744 = vmatprep.subr.mxu0 0.0
        %745 = vmatpush1.msra.mxu0 0.0
        %746 = vmatprep.subr.mxu0 0.0
        %747 = vmatpush1.msra.mxu0 0.0
        %748 = vmatprep.subr.mxu0 0.0
        %749 = vmatpush1.msra.mxu0 0.0
        %750 = vmatprep.subr.mxu0 0.0
        %751 = vmatpush1.msra.mxu0 0.0
        %752 = vmatprep.subr.mxu0 0.0
        %753 = vmatpush1.msra.mxu0 0.0
        %754 = vmatprep.subr.mxu0 0.0
        %755 = vmatpush1.msra.mxu0 0.0
        %756 = vmatprep.subr.mxu0 0.0
        %757 = vmatpush1.msra.mxu0 0.0
        %758 = vmatprep.subr.mxu0 0.0
        %759 = vmatpush1.msra.mxu0 0.0
        %760 = vmatprep.mubr.f32.mxu0 0.0
        %761 = vmatmul.mubr.f32.gmra.mrb[0].mxu0 %v691
        %v762 = vpop.f32.mrb[0].mxu0
        %v763 = vadd.f32 %v379, %v762
        %v764 = vpop.f32.mrb[0].mxu0
        %v765 = vadd.f32 %v380, %v764
        %766 = vmatprep.mubr.f32.mxu0 0.0
        %767 = vmatmul.mubr.f32.gmra.mrb[0].mxu0 %v694
        %v768 = vpop.f32.mrb[0].mxu0
        %v769 = vadd.f32 %v381, %v768
        %v770 = vpop.f32.mrb[0].mxu0
        %v771 = vadd.f32 %v382, %v770
        %772 = vdwg.mxu0
        %775 = vrot.lane.b32.xlu0 %v763, 96
        %v776 = vpop.permute.xlu0 %775
        %777 = vrot.lane.b32.xlu0 %v769, 96
        %v778 = vpop.permute.xlu0 %777
        %781 = vrot.lane.b32.xlu0 %v763, 64
        %v782 = vpop.permute.xlu0 %781
        %783 = vrot.lane.b32.xlu0 %v769, 64
        %v784 = vpop.permute.xlu0 %783
        %787 = vrot.lane.b32.xlu0 %v763, 32
        %v788 = vpop.permute.xlu0 %787
        %789 = vrot.lane.b32.xlu0 %v769, 32
        %v790 = vpop.permute.xlu0 %789
        %793 = vmatprep.subr.mxu0 0.0
        %794 = vmatpush1.msra.mxu0 %v763
        %795 = vmatprep.subr.mxu0 0.0
        %796 = vmatpush1.msra.mxu0 %v769
        %797 = vmatprep.subr.mxu0 0.0
        %798 = vmatpush1.msra.mxu0 %v776
        %799 = vmatprep.subr.mxu0 0.0
        %800 = vmatpush1.msra.mxu0 %v778
        %801 = vmatprep.subr.mxu0 0.0
        %802 = vmatpush1.msra.mxu0 %v782
        %803 = vmatprep.subr.mxu0 0.0
        %804 = vmatpush1.msra.mxu0 %v784
        %805 = vmatprep.subr.mxu0 0.0
        %806 = vmatpush1.msra.mxu0 0.0
        %807 = vmatprep.subr.mxu0 0.0
        %808 = vmatpush1.msra.mxu0 0.0
        %809 = vmatprep.subr.mxu0 0.0
        %810 = vmatpush1.msra.mxu0 0.0
        %811 = vmatprep.subr.mxu0 0.0
        %812 = vmatpush1.msra.mxu0 0.0
        %813 = vmatprep.subr.mxu0 0.0
        %814 = vmatpush1.msra.mxu0 0.0
        %815 = vmatprep.subr.mxu0 0.0
        %816 = vmatpush1.msra.mxu0 0.0
        %817 = vmatprep.subr.mxu0 0.0
        %818 = vmatpush1.msra.mxu0 0.0
        %819 = vmatprep.subr.mxu0 0.0
        %820 = vmatpush1.msra.mxu0 0.0
        %821 = vmatprep.subr.mxu0 0.0
        %822 = vmatpush1.msra.mxu0 0.0
        %823 = vmatprep.subr.mxu0 0.0
        %824 = vmatpush1.msra.mxu0 0.0
        %825 = vmatprep.subr.mxu0 0.0
        %826 = vmatpush1.msra.mxu0 0.0
        %827 = vmatprep.subr.mxu0 0.0
        %828 = vmatpush1.msra.mxu0 0.0
        %829 = vmatprep.subr.mxu0 0.0
        %830 = vmatpush1.msra.mxu0 0.0
        %831 = vmatprep.subr.mxu0 0.0
        %832 = vmatpush1.msra.mxu0 0.0
        %833 = vmatprep.subr.mxu0 0.0
        %834 = vmatpush1.msra.mxu0 0.0
        %835 = vmatprep.subr.mxu0 0.0
        %836 = vmatpush1.msra.mxu0 0.0
        %837 = vmatprep.subr.mxu0 0.0
        %838 = vmatpush1.msra.mxu0 0.0
        %839 = vmatprep.subr.mxu0 0.0
        %840 = vmatpush1.msra.mxu0 0.0
        %841 = vmatprep.subr.mxu0 0.0
        %842 = vmatpush1.msra.mxu0 0.0
        %843 = vmatprep.subr.mxu0 0.0
        %844 = vmatpush1.msra.mxu0 0.0
        %845 = vmatprep.subr.mxu0 0.0
        %846 = vmatpush1.msra.mxu0 0.0
        %847 = vmatprep.subr.mxu0 0.0
        %848 = vmatpush1.msra.mxu0 0.0
        %849 = vmatprep.subr.mxu0 0.0
        %850 = vmatpush1.msra.mxu0 0.0
        %851 = vmatprep.subr.mxu0 0.0
        %852 = vmatpush1.msra.mxu0 0.0
        %853 = vmatprep.subr.mxu0 0.0
        %854 = vmatpush1.msra.mxu0 0.0
        %855 = vmatprep.subr.mxu0 0.0
        %856 = vmatpush1.msra.mxu0 0.0
        %857 = vmatprep.mubr.f32.mxu0 0.0
        %858 = vmatmul.mubr.f32.gmra.mrb[0].mxu0 %v491
        %v859 = vpop.f32.mrb[0].mxu0
        %v860 = vadd.f32 %v788, %v859
        %v861 = vpop.f32.mrb[0].mxu0
        %862 = vmatprep.mubr.f32.mxu0 0.0
        %863 = vmatmul.mubr.f32.gmra.mrb[0].mxu0 %v494
        %v864 = vpop.f32.mrb[0].mxu0
        %v865 = vadd.f32 %v790, %v864
        %v866 = vpop.f32.mrb[0].mxu0
        %867 = vdwg.mxu0
        %v869 = vsel %vm385, %v860, 0
        %v872 = vsel %vm385, %v865, 0
        %874 = vmatprep.subr.mxu0 0.0
        %875 = vmatpush1.msra.mxu0 %v348
        %876 = vmatprep.subr.mxu0 0.0
        %877 = vmatpush1.msra.mxu0 %v349
        %878 = vmatprep.subr.mxu0 0.0
        %879 = vmatpush1.msra.mxu0 %v350
        %880 = vmatprep.subr.mxu0 0.0
        %881 = vmatpush1.msra.mxu0 %v351
        %882 = vmatprep.subr.mxu0 0.0
        %883 = vmatpush1.msra.mxu0 0.0
        %884 = vmatprep.subr.mxu0 0.0
        %885 = vmatpush1.msra.mxu0 0.0
        %886 = vmatprep.subr.mxu0 0.0
        %887 = vmatpush1.msra.mxu0 0.0
        %888 = vmatprep.subr.mxu0 0.0
        %889 = vmatpush1.msra.mxu0 0.0
        %890 = vmatprep.subr.mxu0 0.0
        %891 = vmatpush1.msra.mxu0 0.0
        %892 = vmatprep.subr.mxu0 0.0
        %893 = vmatpush1.msra.mxu0 0.0
        %894 = vmatprep.subr.mxu0 0.0
        %895 = vmatpush1.msra.mxu0 0.0
        %896 = vmatprep.subr.mxu0 0.0
        %897 = vmatpush1.msra.mxu0 0.0
        %898 = vmatprep.subr.mxu0 0.0
        %899 = vmatpush1.msra.mxu0 0.0
        %900 = vmatprep.subr.mxu0 0.0
        %901 = vmatpush1.msra.mxu0 0.0
        %902 = vmatprep.subr.mxu0 0.0
        %903 = vmatpush1.msra.mxu0 0.0
        %904 = vmatprep.subr.mxu0 0.0
        %905 = vmatpush1.msra.mxu0 0.0
        %906 = vmatprep.subr.mxu0 0.0
        %907 = vmatpush1.msra.mxu0 0.0
        %908 = vmatprep.subr.mxu0 0.0
        %909 = vmatpush1.msra.mxu0 0.0
        %910 = vmatprep.subr.mxu0 0.0
        %911 = vmatpush1.msra.mxu0 0.0
        %912 = vmatprep.subr.mxu0 0.0
        %913 = vmatpush1.msra.mxu0 0.0
        %914 = vmatprep.subr.mxu0 0.0
        %915 = vmatpush1.msra.mxu0 0.0
        %916 = vmatprep.subr.mxu0 0.0
        %917 = vmatpush1.msra.mxu0 0.0
        %918 = vmatprep.subr.mxu0 0.0
        %919 = vmatpush1.msra.mxu0 0.0
        %920 = vmatprep.subr.mxu0 0.0
        %921 = vmatpush1.msra.mxu0 0.0
        %922 = vmatprep.subr.mxu0 0.0
        %923 = vmatpush1.msra.mxu0 0.0
        %924 = vmatprep.subr.mxu0 0.0
        %925 = vmatpush1.msra.mxu0 0.0
        %926 = vmatprep.subr.mxu0 0.0
        %927 = vmatpush1.msra.mxu0 0.0
        %928 = vmatprep.subr.mxu0 0.0
        %929 = vmatpush1.msra.mxu0 0.0
        %930 = vmatprep.subr.mxu0 0.0
        %931 = vmatpush1.msra.mxu0 0.0
        %932 = vmatprep.subr.mxu0 0.0
        %933 = vmatpush1.msra.mxu0 0.0
        %934 = vmatprep.subr.mxu0 0.0
        %935 = vmatpush1.msra.mxu0 0.0
        %936 = vmatprep.subr.mxu0 0.0
        %937 = vmatpush1.msra.mxu0 0.0
        %938 = vmatprep.mubr.f32.mxu0 0.0
        %939 = vmatmul.mubr.f32.gmra.mrb[0].mxu0 %v869
        %v940 = vpop.f32.mrb[0].mxu0
        %v941 = vadd.f32 %v765, %v940
        %v942 = vpop.f32.mrb[0].mxu0
        %943 = vmatprep.mubr.f32.mxu0 0.0
        %944 = vmatmul.mubr.f32.gmra.mrb[0].mxu0 %v872
        %v945 = vpop.f32.mrb[0].mxu0
        %v946 = vadd.f32 %v771, %v945
        %v947 = vpop.f32.mrb[0].mxu0
        %948 = vdwg.mxu0
        %v949 = vmul.f32 %v941, 0.5
        %v950 = vmul.f32 %v946, 0.5
        %v951 = vtanh.pop %v949
        %v952 = vtanh.pop %v950
        %v953 = vmul.f32 %v951, 0.5
        %v954 = vmul.f32 %v952, 0.5
        %v955 = vadd.f32 %v953, 0.5
        %v956 = vadd.f32 %v954, 0.5
        %v957 = vmul.f32 %v955, %v361
        %v958 = vmul.f32 %v956, %v366
        %v959 = vmul.f32 %v860, 0.5
        %v960 = vmul.f32 %v865, 0.5
        %v961 = vmul.f32 %v860, 0.044715
        %v962 = vmul.f32 %v865, 0.044715
        %v963 = vmul.f32 %v961, %v860
        %v964 = vmul.f32 %v962, %v865
        %v965 = vmul.f32 %v963, %v860
        %v966 = vmul.f32 %v964, %v865
        %v967 = vadd.f32 %v860, %v965
        %v968 = vadd.f32 %v865, %v966
        %v969 = vmul.f32 %v967, 0.7978846
        %v970 = vmul.f32 %v968, 0.7978846
        %v971 = vtanh.pop %v969
        %v972 = vtanh.pop %v970
        %v973 = vadd.f32 %v971, 1.0
        %v974 = vadd.f32 %v972, 1.0
        %v975 = vmul.f32 %v959, %v973
        %v976 = vmul.f32 %v960, %v974
        %v977 = vmul.f32 %v957, %v975
        %v978 = vmul.f32 %v958, %v976
        %v979 = vsub.f32 1.0, %v957
        %v980 = vsub.f32 1.0, %v958
        %v981 = vmul.f32 %v979, %v686
        %v982 = vmul.f32 %v980, %v687
        %v983 = vadd.f32 %v977, %v981
        %v984 = vadd.f32 %v978, %v982
        %v985 = vmul.f32 %v983, %v361
        %v986 = vmul.f32 %v984, %v366
        %v988 = vsel %vm385, %v985, 0
        %v991 = vsel %vm385, %v986, 0
        %993 = vmatprep.subr.mxu0 %v340
        %994 = vmatpush1.msra.mxu0 %v339
        %995 = vmatprep.subr.mxu0 %v342
        %996 = vmatpush1.msra.mxu0 %v341
        %997 = vmatprep.subr.mxu0 %v344
        %998 = vmatpush1.msra.mxu0 %v343
        %999 = vmatprep.subr.mxu0 %v346
        %1000 = vmatpush1.msra.mxu0 %v345
        %1001 = vmatprep.subr.mxu0 0.0
        %1002 = vmatpush1.msra.mxu0 0.0
        %1003 = vmatprep.subr.mxu0 0.0
        %1004 = vmatpush1.msra.mxu0 0.0
        %1005 = vmatprep.subr.mxu0 0.0
        %1006 = vmatpush1.msra.mxu0 0.0
        %1007 = vmatprep.subr.mxu0 0.0
        %1008 = vmatpush1.msra.mxu0 0.0
        %1009 = vmatprep.subr.mxu0 0.0
        %1010 = vmatpush1.msra.mxu0 0.0
        %1011 = vmatprep.subr.mxu0 0.0
        %1012 = vmatpush1.msra.mxu0 0.0
        %1013 = vmatprep.subr.mxu0 0.0
        %1014 = vmatpush1.msra.mxu0 0.0
        %1015 = vmatprep.subr.mxu0 0.0
        %1016 = vmatpush1.msra.mxu0 0.0
        %1017 = vmatprep.subr.mxu0 0.0
        %1018 = vmatpush1.msra.mxu0 0.0
        %1019 = vmatprep.subr.mxu0 0.0
        %1020 = vmatpush1.msra.mxu0 0.0
        %1021 = vmatprep.subr.mxu0 0.0
        %1022 = vmatpush1.msra.mxu0 0.0
        %1023 = vmatprep.subr.mxu0 0.0
        %1024 = vmatpush1.msra.mxu0 0.0
        %1025 = vmatprep.subr.mxu0 0.0
        %1026 = vmatpush1.msra.mxu0 0.0
        %1027 = vmatprep.subr.mxu0 0.0
        %1028 = vmatpush1.msra.mxu0 0.0
        %1029 = vmatprep.subr.mxu0 0.0
        %1030 = vmatpush1.msra.mxu0 0.0
        %1031 = vmatprep.subr.mxu0 0.0
        %1032 = vmatpush1.msra.mxu0 0.0
        %1033 = vmatprep.subr.mxu0 0.0
        %1034 = vmatpush1.msra.mxu0 0.0
        %1035 = vmatprep.subr.mxu0 0.0
        %1036 = vmatpush1.msra.mxu0 0.0
        %1037 = vmatprep.subr.mxu0 0.0
        %1038 = vmatpush1.msra.mxu0 0.0
        %1039 = vmatprep.subr.mxu0 0.0
        %1040 = vmatpush1.msra.mxu0 0.0
        %1041 = vmatprep.subr.mxu0 0.0
        %1042 = vmatpush1.msra.mxu0 0.0
        %1043 = vmatprep.subr.mxu0 0.0
        %1044 = vmatpush1.msra.mxu0 0.0
        %1045 = vmatprep.subr.mxu0 0.0
        %1046 = vmatpush1.msra.mxu0 0.0
        %1047 = vmatprep.subr.mxu0 0.0
        %1048 = vmatpush1.msra.mxu0 0.0
        %1049 = vmatprep.subr.mxu0 0.0
        %1050 = vmatpush1.msra.mxu0 0.0
        %1051 = vmatprep.subr.mxu0 0.0
        %1052 = vmatpush1.msra.mxu0 0.0
        %1053 = vmatprep.subr.mxu0 0.0
        %1054 = vmatpush1.msra.mxu0 0.0
        %1055 = vmatprep.subr.mxu0 0.0
        %1056 = vmatpush1.msra.mxu0 0.0
        %1057 = vmatprep.mubr.f32.mxu0 0.0
        %1058 = vmatmul.mubr.f32.gmra.mrb[0].mxu0 %v988
        %v1059 = vpop.f32.mrb[0].mxu0
        %v1060 = vadd.f32 %v379, %v1059
        %v1061 = vpop.f32.mrb[0].mxu0
        %v1062 = vadd.f32 %v380, %v1061
        %1063 = vmatprep.mubr.f32.mxu0 0.0
        %1064 = vmatmul.mubr.f32.gmra.mrb[0].mxu0 %v991
        %v1065 = vpop.f32.mrb[0].mxu0
        %v1066 = vadd.f32 %v381, %v1065
        %v1067 = vpop.f32.mrb[0].mxu0
        %v1068 = vadd.f32 %v382, %v1067
        %1069 = vdwg.mxu0
        %1072 = vrot.lane.b32.xlu0 %v1060, 96
        %v1073 = vpop.permute.xlu0 %1072
        %1074 = vrot.lane.b32.xlu0 %v1066, 96
        %v1075 = vpop.permute.xlu0 %1074
        %1078 = vrot.lane.b32.xlu0 %v1060, 64
        %v1079 = vpop.permute.xlu0 %1078
        %1080 = vrot.lane.b32.xlu0 %v1066, 64
        %v1081 = vpop.permute.xlu0 %1080
        %1084 = vrot.lane.b32.xlu0 %v1060, 32
        %v1085 = vpop.permute.xlu0 %1084
        %1086 = vrot.lane.b32.xlu0 %v1066, 32
        %v1087 = vpop.permute.xlu0 %1086
        %1090 = vmatprep.subr.mxu0 0.0
        %1091 = vmatpush1.msra.mxu0 %v1060
        %1092 = vmatprep.subr.mxu0 0.0
        %1093 = vmatpush1.msra.mxu0 %v1066
        %1094 = vmatprep.subr.mxu0 0.0
        %1095 = vmatpush1.msra.mxu0 %v1073
        %1096 = vmatprep.subr.mxu0 0.0
        %1097 = vmatpush1.msra.mxu0 %v1075
        %1098 = vmatprep.subr.mxu0 0.0
        %1099 = vmatpush1.msra.mxu0 %v1079
        %1100 = vmatprep.subr.mxu0 0.0
        %1101 = vmatpush1.msra.mxu0 %v1081
        %1102 = vmatprep.subr.mxu0 0.0
        %1103 = vmatpush1.msra.mxu0 0.0
        %1104 = vmatprep.subr.mxu0 0.0
        %1105 = vmatpush1.msra.mxu0 0.0
        %1106 = vmatprep.subr.mxu0 0.0
        %1107 = vmatpush1.msra.mxu0 0.0
        %1108 = vmatprep.subr.mxu0 0.0
        %1109 = vmatpush1.msra.mxu0 0.0
        %1110 = vmatprep.subr.mxu0 0.0
        %1111 = vmatpush1.msra.mxu0 0.0
        %1112 = vmatprep.subr.mxu0 0.0
        %1113 = vmatpush1.msra.mxu0 0.0
        %1114 = vmatprep.subr.mxu0 0.0
        %1115 = vmatpush1.msra.mxu0 0.0
        %1116 = vmatprep.subr.mxu0 0.0
        %1117 = vmatpush1.msra.mxu0 0.0
        %1118 = vmatprep.subr.mxu0 0.0
        %1119 = vmatpush1.msra.mxu0 0.0
        %1120 = vmatprep.subr.mxu0 0.0
        %1121 = vmatpush1.msra.mxu0 0.0
        %1122 = vmatprep.subr.mxu0 0.0
        %1123 = vmatpush1.msra.mxu0 0.0
        %1124 = vmatprep.subr.mxu0 0.0
        %1125 = vmatpush1.msra.mxu0 0.0
        %1126 = vmatprep.subr.mxu0 0.0
        %1127 = vmatpush1.msra.mxu0 0.0
        %1128 = vmatprep.subr.mxu0 0.0
        %1129 = vmatpush1.msra.mxu0 0.0
        %1130 = vmatprep.subr.mxu0 0.0
        %1131 = vmatpush1.msra.mxu0 0.0
        %1132 = vmatprep.subr.mxu0 0.0
        %1133 = vmatpush1.msra.mxu0 0.0
        %1134 = vmatprep.subr.mxu0 0.0
        %1135 = vmatpush1.msra.mxu0 0.0
        %1136 = vmatprep.subr.mxu0 0.0
        %1137 = vmatpush1.msra.mxu0 0.0
        %1138 = vmatprep.subr.mxu0 0.0
        %1139 = vmatpush1.msra.mxu0 0.0
        %1140 = vmatprep.subr.mxu0 0.0
        %1141 = vmatpush1.msra.mxu0 0.0
        %1142 = vmatprep.subr.mxu0 0.0
        %1143 = vmatpush1.msra.mxu0 0.0
        %1144 = vmatprep.subr.mxu0 0.0
        %1145 = vmatpush1.msra.mxu0 0.0
        %1146 = vmatprep.subr.mxu0 0.0
        %1147 = vmatpush1.msra.mxu0 0.0
        %1148 = vmatprep.subr.mxu0 0.0
        %1149 = vmatpush1.msra.mxu0 0.0
        %1150 = vmatprep.subr.mxu0 0.0
        %1151 = vmatpush1.msra.mxu0 0.0
        %1152 = vmatprep.subr.mxu0 0.0
        %1153 = vmatpush1.msra.mxu0 0.0
        %1154 = vmatprep.mubr.f32.mxu0 0.0
        %1155 = vmatmul.mubr.f32.gmra.mrb[0].mxu0 %v491
        %v1156 = vpop.f32.mrb[0].mxu0
        %v1157 = vadd.f32 %v1085, %v1156
        %v1158 = vpop.f32.mrb[0].mxu0
        %1159 = vmatprep.mubr.f32.mxu0 0.0
        %1160 = vmatmul.mubr.f32.gmra.mrb[0].mxu0 %v494
        %v1161 = vpop.f32.mrb[0].mxu0
        %v1162 = vadd.f32 %v1087, %v1161
        %v1163 = vpop.f32.mrb[0].mxu0
        %1164 = vdwg.mxu0
        %v1166 = vsel %vm385, %v1157, 0
        %v1169 = vsel %vm385, %v1162, 0
        %1171 = vmatprep.subr.mxu0 0.0
        %1172 = vmatpush1.msra.mxu0 %v348
        %1173 = vmatprep.subr.mxu0 0.0
        %1174 = vmatpush1.msra.mxu0 %v349
        %1175 = vmatprep.subr.mxu0 0.0
        %1176 = vmatpush1.msra.mxu0 %v350
        %1177 = vmatprep.subr.mxu0 0.0
        %1178 = vmatpush1.msra.mxu0 %v351
        %1179 = vmatprep.subr.mxu0 0.0
        %1180 = vmatpush1.msra.mxu0 0.0
        %1181 = vmatprep.subr.mxu0 0.0
        %1182 = vmatpush1.msra.mxu0 0.0
        %1183 = vmatprep.subr.mxu0 0.0
        %1184 = vmatpush1.msra.mxu0 0.0
        %1185 = vmatprep.subr.mxu0 0.0
        %1186 = vmatpush1.msra.mxu0 0.0
        %1187 = vmatprep.subr.mxu0 0.0
        %1188 = vmatpush1.msra.mxu0 0.0
        %1189 = vmatprep.subr.mxu0 0.0
        %1190 = vmatpush1.msra.mxu0 0.0
        %1191 = vmatprep.subr.mxu0 0.0
        %1192 = vmatpush1.msra.mxu0 0.0
        %1193 = vmatprep.subr.mxu0 0.0
        %1194 = vmatpush1.msra.mxu0 0.0
        %1195 = vmatprep.subr.mxu0 0.0
        %1196 = vmatpush1.msra.mxu0 0.0
        %1197 = vmatprep.subr.mxu0 0.0
        %1198 = vmatpush1.msra.mxu0 0.0
        %1199 = vmatprep.subr.mxu0 0.0
        %1200 = vmatpush1.msra.mxu0 0.0
        %1201 = vmatprep.subr.mxu0 0.0
        %1202 = vmatpush1.msra.mxu0 0.0
        %1203 = vmatprep.subr.mxu0 0.0
        %1204 = vmatpush1.msra.mxu0 0.0
        %1205 = vmatprep.subr.mxu0 0.0
        %1206 = vmatpush1.msra.mxu0 0.0
        %1207 = vmatprep.subr.mxu0 0.0
        %1208 = vmatpush1.msra.mxu0 0.0
        %1209 = vmatprep.subr.mxu0 0.0
        %1210 = vmatpush1.msra.mxu0 0.0
        %1211 = vmatprep.subr.mxu0 0.0
        %1212 = vmatpush1.msra.mxu0 0.0
        %1213 = vmatprep.subr.mxu0 0.0
        %1214 = vmatpush1.msra.mxu0 0.0
        %1215 = vmatprep.subr.mxu0 0.0
        %1216 = vmatpush1.msra.mxu0 0.0
        %1217 = vmatprep.subr.mxu0 0.0
        %1218 = vmatpush1.msra.mxu0 0.0
        %1219 = vmatprep.subr.mxu0 0.0
        %1220 = vmatpush1.msra.mxu0 0.0
        %1221 = vmatprep.subr.mxu0 0.0
        %1222 = vmatpush1.msra.mxu0 0.0
        %1223 = vmatprep.subr.mxu0 0.0
        %1224 = vmatpush1.msra.mxu0 0.0
        %1225 = vmatprep.subr.mxu0 0.0
        %1226 = vmatpush1.msra.mxu0 0.0
        %1227 = vmatprep.subr.mxu0 0.0
        %1228 = vmatpush1.msra.mxu0 0.0
        %1229 = vmatprep.subr.mxu0 0.0
        %1230 = vmatpush1.msra.mxu0 0.0
        %1231 = vmatprep.subr.mxu0 0.0
        %1232 = vmatpush1.msra.mxu0 0.0
        %1233 = vmatprep.subr.mxu0 0.0
        %1234 = vmatpush1.msra.mxu0 0.0
        %1235 = vmatprep.mubr.f32.mxu0 0.0
        %1236 = vmatmul.mubr.f32.gmra.mrb[0].mxu0 %v1166
        %v1237 = vpop.f32.mrb[0].mxu0
        %v1238 = vadd.f32 %v1062, %v1237
        %v1239 = vpop.f32.mrb[0].mxu0
        %1240 = vmatprep.mubr.f32.mxu0 0.0
        %1241 = vmatmul.mubr.f32.gmra.mrb[0].mxu0 %v1169
        %v1242 = vpop.f32.mrb[0].mxu0
        %v1243 = vadd.f32 %v1068, %v1242
        %v1244 = vpop.f32.mrb[0].mxu0
        %1245 = vdwg.mxu0
        %v1246 = vmul.f32 %v1238, 0.5
        %v1247 = vmul.f32 %v1243, 0.5
        %v1248 = vtanh.pop %v1246
        %v1249 = vtanh.pop %v1247
        %v1250 = vmul.f32 %v1248, 0.5
        %v1251 = vmul.f32 %v1249, 0.5
        %v1252 = vadd.f32 %v1250, 0.5
        %v1253 = vadd.f32 %v1251, 0.5
        %v1254 = vmul.f32 %v1252, %v361
        %v1255 = vmul.f32 %v1253, %v366
        %v1256 = vmul.f32 %v1157, 0.5
        %v1257 = vmul.f32 %v1162, 0.5
        %v1258 = vmul.f32 %v1157, 0.044715
        %v1259 = vmul.f32 %v1162, 0.044715
        %v1260 = vmul.f32 %v1258, %v1157
        %v1261 = vmul.f32 %v1259, %v1162
        %v1262 = vmul.f32 %v1260, %v1157
        %v1263 = vmul.f32 %v1261, %v1162
        %v1264 = vadd.f32 %v1157, %v1262
        %v1265 = vadd.f32 %v1162, %v1263
        %v1266 = vmul.f32 %v1264, 0.7978846
        %v1267 = vmul.f32 %v1265, 0.7978846
        %v1268 = vtanh.pop %v1266
        %v1269 = vtanh.pop %v1267
        %v1270 = vadd.f32 %v1268, 1.0
        %v1271 = vadd.f32 %v1269, 1.0
        %v1272 = vmul.f32 %v1256, %v1270
        %v1273 = vmul.f32 %v1257, %v1271
        %v1274 = vmul.f32 %v1254, %v1272
        %v1275 = vmul.f32 %v1255, %v1273
        %v1276 = vsub.f32 1.0, %v1254
        %v1277 = vsub.f32 1.0, %v1255
        %v1278 = vmul.f32 %v1276, %v983
        %v1279 = vmul.f32 %v1277, %v984
        %v1280 = vadd.f32 %v1274, %v1278
        %v1281 = vadd.f32 %v1275, %v1279
        %1282 = vst.msk [vmem:[%s328] sm:$0xff] %vm385, %v1280
        %1283 = vst.msk [vmem:[%s328 + $0x8] sm:$0xff] %vm385, %v1281
        %s1284 = sand.u32 %s173, 1
        %s1285 = scalar_lea.sflag [#allocation4], %s1284
        %s1286 = sand.u32 %s173, 1
        %s1287 = smul.addr %s1286, 16
        %s1288 = scalar_lea.vmem [#allocation8], %s1287
        // Predicated region
        $region57: #{tpu_custom_call.1} parent=43 // pred_check
          %p1289 = pneg %p183
        $region58: #{tpu_custom_call.1} parent=43 // pred_check_branch
          %1291 = sbr.rel (%p1289) target = $region60
        $region59: #{tpu_custom_call.1} parent=43 // pred_region
          %s1293 = ssub.s32 256, 256
          %1294 = vsyncadd %s1285, %s1293
          %s1295 = smul.addr %s24, 2
          %s1296 = smul.addr %s1295, 128
          %s1297 = scalar_lea.hbm %s6, %s1296
          %s1298 = sshll.u32 %s1288, 4
          %s1299 = int_to_ptr.vmem [resolvable:$true] %s1298
          %1304 = dma.vmem_to_hbm [thread:$0]  %s1299, 256, %s1297, %s1285, 128, 128, 8
        $region60: #{tpu_custom_call.1} parent=43 // pred_fallthru
          _
      $region44: #{tpu_custom_call.1} parent=5 // pred_fallthru
        _
      %p1305 = scmp.le.s32.totalorder 2, %s19
      // Predicated region
      $region61: #{tpu_custom_call.1} parent=5 // pred_check
        %p1306 = pneg %p1305
      $region62: #{tpu_custom_call.1} parent=5 // pred_check_branch
        %1308 = sbr.rel (%p1306) target = $region64
      $region63: #{tpu_custom_call.1} parent=5 // pred_region
        %s1309 = ssub.s32 %s19, 2
        // Predicated region
        $region65: #{tpu_custom_call.1} parent=63 // pred_check
          %p1310 = pneg %p189
        $region66: #{tpu_custom_call.1} parent=63 // pred_check_branch
          %1312 = sbr.rel (%p1310) target = $region68
        $region67: #{tpu_custom_call.1} parent=63 // pred_region
          %s1313 = sand.u32 %s174, 1
          %s1314 = scalar_lea.sflag [#allocation4], %s1313
          %s1315 = sand.u32 %s174, 1
          %s1316 = smul.addr %s1315, 16
          %s1317 = scalar_lea.vmem [#allocation8], %s1316
          %1318 = dma.done %s1314, 256
        $region68: #{tpu_custom_call.1} parent=63 // pred_fallthru
          _
      $region64: #{tpu_custom_call.1} parent=5 // pred_fallthru
        _
    $region6: #{tpu_custom_call.1} parent=1 // loop_footer
      %s23 = sadd.s32 1, %s19
    $region7: #{tpu_custom_call.1} parent=1 // loop_footer_branch
      %18 = sbr.rel target = $region3
    $region8: #{tpu_custom_call.1} parent=1 // loop_exit
      _
    %1319 = vsyncpa [#allocation3], 1
    %s1320 = scalar_lea.sflag [#allocation3], 1
    %1321 = vsyncpa %s1320, 1
    %1322 = vsyncpa [#allocation6], 1
    %1323 = vsyncpa [#allocation4], 1
    %s1324 = scalar_lea.sflag [#allocation4], 1
    %1325 = vsyncpa %s1324, 1

</llo_original>
